<compile_context>
chip_gen: v5e
topology: v5e:2x2
jax: 0.10.0
libtpu: 0.0.40
codegen_flags: <defaults>
</compile_context>

<pallas_src>
import jax
import jax.numpy as jnp
from jax import lax
from jax.experimental import pallas as pl
from jax.experimental.pallas import tpu as pltpu

# Module hyper-parameters (small, consistent with the PyTorch script).
NUM_HIDDENS = 128   # num_hiddens in the module
NUM_STEPS = 8       # num_steps in the module
BATCH = 8           # small batch
VOCAB = 32          # synthetic vocab_size
LANE = 128          # lane width the V=32 logits path is padded to


def lstm_kernel(gx_ref, whh_ref, wd_ref, bd_ref, h0_ref, c0_ref,
                y_ref, h_out_ref, c_out_ref, hs_sc):
    """Single-invocation LSTM forward (no time grid).

    gx_ref:  (T*B, 4H) f32   precomputed x_t @ W_ih^T + b, gate cols [i, f, o, g]
    whh_ref: (H, 4H)   bf16  transposed weight_hh_l0, gate cols [i, f, o, g]
    wd_ref:  (H, LANE) f32   transposed dense weight, zero-padded V -> LANE
    bd_ref:  (1, LANE) f32   dense bias, zero-padded V -> LANE
    h0_ref, c0_ref: (B, H) f32  initial state (aliased with h_out / c_out)
    y_ref:   (T*B, LANE) f32 padded logits
    h_out_ref, c_out_ref: (B, H) final state
    hs_sc:   VMEM (T*B, H)   per-step hidden states (lane-dense, H = 128)
    """
    B, H = h0_ref.shape
    T = gx_ref.shape[0] // B

    # Serial recurrence; h/c carried in vregs, loop fully unrolled so the
    # scheduler sees the whole dependency chain.
    def step(t, carry):
        h_prev, c_prev = carry
        off = pl.multiple_of(t * B, B)
        # bf16 MXU operands, f32 accumulate; the gx add stays in f32 on the VPU.
        gates = (gx_ref[pl.ds(off, B), :]
                 + jnp.dot(h_prev.astype(jnp.bfloat16), whh_ref[...],
                           preferred_element_type=jnp.float32))
        # Gate columns pre-ordered [i, f, o, g]: one sigmoid over the contiguous
        # 3H slab, one tanh over the trailing H slab (EUP-friendly).
        sig = jax.nn.sigmoid(gates[:, 0:3 * H])
        i_g = sig[:, 0 * H:1 * H]
        f_g = sig[:, 1 * H:2 * H]
        o_g = sig[:, 2 * H:3 * H]
        g_g = jnp.tanh(gates[:, 3 * H:4 * H])

        c_new = f_g * c_prev + i_g * g_g
        h_new = o_g * jnp.tanh(c_new)

        # Lane-dense (H = 128 wide) per-step store for the batched output Linear.
        hs_sc[pl.ds(off, B), :] = h_new
        return h_new, c_new

    h_fin, c_fin = lax.fori_loop(0, T, step, (h0_ref[...], c0_ref[...]),
                                 unroll=True)

    h_out_ref[...] = h_fin
    c_out_ref[...] = c_fin

    # Output Linear hoisted out of the recurrence: one (T*B, H) @ (H, LANE) with
    # unmasked lane-dense stores (padded columns stay zero, sliced off outside).
    y_ref[...] = (jnp.dot(hs_sc[...], wd_ref[...],
                          preferred_element_type=jnp.float32)
                  + bd_ref[...])


def _reorder_ifgo_to_ifog(w, axis):
    """Reorder PyTorch gate blocks [i, f, g, o] -> [i, f, o, g] along `axis`."""
    i, f, g, o = jnp.split(w, 4, axis=axis)
    return jnp.concatenate([i, f, o, g], axis=axis)


def prepare_params(params):
    """One-time parameter prep (hoisted off the per-call dispatch path)."""
    w_ih, w_hh, b_ih, b_hh, w_dense, b_dense = params
    V = w_ih.shape[1]
    H = w_hh.shape[1]
    # Gate columns reordered [i,f,g,o] -> [i,f,o,g]; bias fused into the table so
    # a single row gather yields x_t @ W_ih^T + (b_ih + b_hh).
    gx_table = (_reorder_ifgo_to_ifog(w_ih.T, axis=1)
                + _reorder_ifgo_to_ifog((b_ih + b_hh).reshape(1, 4 * H), axis=1))
    # Recurrence weight pre-cast to bf16 once (MXU operand; accumulation is f32).
    whh_bf16 = _reorder_ifgo_to_ifog(w_hh.T, axis=1).astype(jnp.bfloat16)
    # Lane-dense output path: pad V -> LANE so the kernel's y stores are unmasked.
    wd_pad = jnp.zeros((H, LANE), jnp.float32).at[:, :V].set(w_dense.T)
    bd_pad = jnp.zeros((1, LANE), jnp.float32).at[:, :V].set(b_dense)
    return gx_table, whh_bf16, wd_pad, bd_pad


@jax.jit
def lstm_forward(inputs, prepped, h0, c0):
    """Mirrors LSTMModel.forward.

    inputs: int32 (B, T) token ids; prepped: output of prepare_params.
    returns: (logits (T*B, V), (h (1,B,H), c (1,B,H)))
    """
    gx_table, whh_bf16, wd_pad, bd_pad = prepped
    B, T = inputs.shape
    V = gx_table.shape[0]
    H = whh_bf16.shape[0]

    # torch.stack(to_onehot(X, vocab)) @ W_ih^T + b, computed as a row gather
    # (x is one-hot), flattened seq-major then batch: (T*B, 4H) f32.
    gx = jnp.take(gx_table, inputs.T.reshape(-1), axis=0)

    y_pad, h_fin, c_fin = pl.pallas_call(
        lstm_kernel,
        out_shape=(
            jax.ShapeDtypeStruct((T * B, LANE), jnp.float32),   # padded logits
            jax.ShapeDtypeStruct((B, H), jnp.float32),          # final h
            jax.ShapeDtypeStruct((B, H), jnp.float32),          # final c
        ),
        scratch_shapes=[
            pltpu.VMEM((T * B, H), jnp.float32),   # per-step h slab (lane-dense)
        ],
        # h0 -> final h, c0 -> final c share buffers (state updated in place).
        input_output_aliases={4: 1, 5: 2},
    )(gx, whh_bf16, wd_pad, bd_pad, h0, c0)

    # torch: output = dense(Y.view(-1, H)) -> (T*B, V); state shapes (1, B, H).
    return y_pad[:, :V], (h_fin[None], c_fin[None])


def lstm_forward_ref(inputs, params, h0, c0):
    """Pure-JAX f32 reference (lax.scan) for correctness checking."""
    w_ih, w_hh, b_ih, b_hh, w_dense, b_dense = params
    V = w_ih.shape[1]
    H = w_hh.shape[1]
    x_onehot = jax.nn.one_hot(inputs.T, V, dtype=jnp.float32)   # (T, B, V)

    def step(carry, x_t):
        h, c = carry
        gates = x_t @ w_ih.T + b_ih + h @ w_hh.T + b_hh
        i_g = jax.nn.sigmoid(gates[:, 0 * H:1 * H])
        f_g = jax.nn.sigmoid(gates[:, 1 * H:2 * H])
        g_g = jnp.tanh(gates[:, 2 * H:3 * H])
        o_g = jax.nn.sigmoid(gates[:, 3 * H:4 * H])
        c_new = f_g * c + i_g * g_g
        h_new = o_g * jnp.tanh(c_new)
        return (h_new, c_new), h_new

    (h_fin, c_fin), hs = jax.lax.scan(step, (h0, c0), x_onehot)
    logits = hs.reshape(-1, H) @ w_dense.T + b_dense
    return logits, (h_fin[None], c_fin[None])


def init_params(key, vocab, hidden):
    """Deterministic parameter init (same shapes/distribution as nn.LSTM / nn.Linear)."""
    k = 1.0 / jnp.sqrt(hidden)
    keys = jax.random.split(key, 6)
    w_ih = jax.random.uniform(keys[0], (4 * hidden, vocab), jnp.float32, -k, k)
    w_hh = jax.random.uniform(keys[1], (4 * hidden, hidden), jnp.float32, -k, k)
    b_ih = jax.random.uniform(keys[2], (4 * hidden,), jnp.float32, -k, k)
    b_hh = jax.random.uniform(keys[3], (4 * hidden,), jnp.float32, -k, k)
    w_dense = jax.random.uniform(keys[4], (vocab, hidden), jnp.float32, -k, k)
    b_dense = jax.random.uniform(keys[5], (vocab,), jnp.float32, -k, k)
    return (w_ih, w_hh, b_ih, b_hh, w_dense, b_dense)


if __name__ == "__main__":
    key = jax.random.PRNGKey(0)
    pkey, xkey = jax.random.split(key)

    params = init_params(pkey, VOCAB, NUM_HIDDENS)
    prepped = prepare_params(params)   # one-time: transposes / gate reorder / bf16 cast / padding
    inputs = jax.random.randint(xkey, (BATCH, NUM_STEPS), 0, VOCAB, dtype=jnp.int32)

    # Kernel layout assumptions: f32 (8, 128) tile alignment of the state carries
    # and the per-step row slices.
    assert BATCH % 8 == 0 and NUM_HIDDENS % 128 == 0

    # state=None in the PyTorch module -> zero initial state.
    h0 = jnp.zeros((BATCH, NUM_HIDDENS), jnp.float32)
    c0 = jnp.zeros((BATCH, NUM_HIDDENS), jnp.float32)

    logits, (h_fin, c_fin) = lstm_forward(inputs, prepped, h0, c0)
    jax.block_until_ready((logits, h_fin, c_fin))

    ref_logits, (ref_h, ref_c) = lstm_forward_ref(inputs, params, h0, c0)

    assert logits.shape == (NUM_STEPS * BATCH, VOCAB)
    assert h_fin.shape == (1, BATCH, NUM_HIDDENS)
    assert c_fin.shape == (1, BATCH, NUM_HIDDENS)
    # bf16 MXU operands on the recurrence matmul -> ~1e-3-level deviation from
    # the f32 reference at this scale; 2e-2 is a comfortable bound.
    assert jnp.allclose(logits, ref_logits, atol=2e-2, rtol=2e-2)
    assert jnp.allclose(h_fin, ref_h, atol=2e-2, rtol=2e-2)
    assert jnp.allclose(c_fin, ref_c, atol=2e-2, rtol=2e-2)

    print("KERNEL_OK")
</pallas_src>

<mosaic_0001>
module attributes {stable_mosaic.version = 11 : i64} {
  func.func @lstm_kernel(%arg0: memref<64x512xf32, #tpu.memory_space<vmem>>, %arg1: memref<128x512xbf16, #tpu.memory_space<vmem>>, %arg2: memref<128x128xf32, #tpu.memory_space<vmem>>, %arg3: memref<1x128xf32, #tpu.memory_space<vmem>>, %arg4: memref<8x128xf32, #tpu.memory_space<vmem>>, %arg5: memref<8x128xf32, #tpu.memory_space<vmem>>, %arg6: memref<64x128xf32, #tpu.memory_space<vmem>>, %arg7: memref<8x128xf32, #tpu.memory_space<vmem>>, %arg8: memref<8x128xf32, #tpu.memory_space<vmem>>, %arg9: memref<64x128xf32, #tpu.memory_space<vmem>>) attributes {dimension_semantics = [], scalar_prefetch = 0 : i64, scratch_operands = 1 : i64, tpu.core_type = #tpu.core_type<tc>} {
    %c0 = arith.constant 0 : index
    %c0_0 = arith.constant 0 : index
    %0 = vector.load %arg4[%c0, %c0_0] : memref<8x128xf32, #tpu.memory_space<vmem>>, vector<8x128xf32>
    %c0_1 = arith.constant 0 : index
    %c0_2 = arith.constant 0 : index
    %1 = vector.load %arg5[%c0_1, %c0_2] : memref<8x128xf32, #tpu.memory_space<vmem>>, vector<8x128xf32>
    %c0_i32 = arith.constant 0 : i32
    %c8_i32 = arith.constant 8 : i32
    %2 = arith.muli %c0_i32, %c8_i32 : i32
    %3 = tpu.assume_multiple %2, 8 : i32
    %4 = arith.index_cast %3 : i32 to index
    %c0_3 = arith.constant 0 : index
    %5 = vector.load %arg0[%4, %c0_3] : memref<64x512xf32, #tpu.memory_space<vmem>>, vector<8x512xf32>
    %6 = arith.truncf %0 : vector<8x128xf32> to vector<8x128xbf16>
    %c0_4 = arith.constant 0 : index
    %c0_5 = arith.constant 0 : index
    %7 = vector.load %arg1[%c0_4, %c0_5] : memref<128x512xbf16, #tpu.memory_space<vmem>>, vector<128x512xbf16>
    %cst = arith.constant dense<0.000000e+00> : vector<8x512xf32>
    %8 = tpu.matmul %6, %7, %cst {dimension_numbers = #tpu.dot_dimension_numbers<[1], [0], [0], [1], [0, 0, 1, 1], [], []>} : vector<8x128xbf16>, vector<128x512xbf16>, vector<8x512xf32> -> vector<8x512xf32>
    %9 = arith.addf %5, %8 : vector<8x512xf32>
    %10 = vector.extract_strided_slice %9 {offsets = [0, 0], sizes = [8, 384], strides = [1, 1]} : vector<8x512xf32> to vector<8x384xf32>
    %11 = arith.negf %10 : vector<8x384xf32>
    %12 = math.exp %11 : vector<8x384xf32>
    %cst_6 = arith.constant 1.000000e+00 : f32
    %13 = vector.broadcast %cst_6 : f32 to vector<8x384xf32>
    %14 = arith.addf %13, %12 : vector<8x384xf32>
    %15 = arith.divf %13, %14 : vector<8x384xf32>
    %16 = vector.extract_strided_slice %15 {offsets = [0, 0], sizes = [8, 128], strides = [1, 1]} : vector<8x384xf32> to vector<8x128xf32>
    %17 = vector.extract_strided_slice %15 {offsets = [0, 128], sizes = [8, 128], strides = [1, 1]} : vector<8x384xf32> to vector<8x128xf32>
    %18 = vector.extract_strided_slice %15 {offsets = [0, 256], sizes = [8, 128], strides = [1, 1]} : vector<8x384xf32> to vector<8x128xf32>
    %19 = vector.extract_strided_slice %9 {offsets = [0, 384], sizes = [8, 128], strides = [1, 1]} : vector<8x512xf32> to vector<8x128xf32>
    %20 = math.tanh %19 : vector<8x128xf32>
    %21 = arith.mulf %17, %1 : vector<8x128xf32>
    %22 = arith.mulf %16, %20 : vector<8x128xf32>
    %23 = arith.addf %21, %22 : vector<8x128xf32>
    %24 = math.tanh %23 : vector<8x128xf32>
    %25 = arith.mulf %18, %24 : vector<8x128xf32>
    %26 = arith.index_cast %3 : i32 to index
    %c0_7 = arith.constant 0 : index
    %27 = vector.load %arg9[%26, %c0_7] : memref<64x128xf32, #tpu.memory_space<vmem>>, vector<8x128xf32>
    tpu.vector_store %arg9[%26, %c0_7], %25 {strides = array<i32>} : memref<64x128xf32, #tpu.memory_space<vmem>>, vector<8x128xf32>,
    %c1_i32 = arith.constant 1 : i32
    %c8_i32_8 = arith.constant 8 : i32
    %28 = arith.muli %c1_i32, %c8_i32_8 : i32
    %29 = tpu.assume_multiple %28, 8 : i32
    %30 = arith.index_cast %29 : i32 to index
    %c0_9 = arith.constant 0 : index
    %31 = vector.load %arg0[%30, %c0_9] : memref<64x512xf32, #tpu.memory_space<vmem>>, vector<8x512xf32>
    %32 = arith.truncf %25 : vector<8x128xf32> to vector<8x128xbf16>
    %c0_10 = arith.constant 0 : index
    %c0_11 = arith.constant 0 : index
    %33 = vector.load %arg1[%c0_10, %c0_11] : memref<128x512xbf16, #tpu.memory_space<vmem>>, vector<128x512xbf16>
    %cst_12 = arith.constant dense<0.000000e+00> : vector<8x512xf32>
    %34 = tpu.matmul %32, %33, %cst_12 {dimension_numbers = #tpu.dot_dimension_numbers<[1], [0], [0], [1], [0, 0, 1, 1], [], []>} : vector<8x128xbf16>, vector<128x512xbf16>, vector<8x512xf32> -> vector<8x512xf32>
    %35 = arith.addf %31, %34 : vector<8x512xf32>
    %36 = vector.extract_strided_slice %35 {offsets = [0, 0], sizes = [8, 384], strides = [1, 1]} : vector<8x512xf32> to vector<8x384xf32>
    %37 = arith.negf %36 : vector<8x384xf32>
    %38 = math.exp %37 : vector<8x384xf32>
    %cst_13 = arith.constant 1.000000e+00 : f32
    %39 = vector.broadcast %cst_13 : f32 to vector<8x384xf32>
    %40 = arith.addf %39, %38 : vector<8x384xf32>
    %41 = arith.divf %39, %40 : vector<8x384xf32>
    %42 = vector.extract_strided_slice %41 {offsets = [0, 0], sizes = [8, 128], strides = [1, 1]} : vector<8x384xf32> to vector<8x128xf32>
    %43 = vector.extract_strided_slice %41 {offsets = [0, 128], sizes = [8, 128], strides = [1, 1]} : vector<8x384xf32> to vector<8x128xf32>
    %44 = vector.extract_strided_slice %41 {offsets = [0, 256], sizes = [8, 128], strides = [1, 1]} : vector<8x384xf32> to vector<8x128xf32>
    %45 = vector.extract_strided_slice %35 {offsets = [0, 384], sizes = [8, 128], strides = [1, 1]} : vector<8x512xf32> to vector<8x128xf32>
    %46 = math.tanh %45 : vector<8x128xf32>
    %47 = arith.mulf %43, %23 : vector<8x128xf32>
    %48 = arith.mulf %42, %46 : vector<8x128xf32>
    %49 = arith.addf %47, %48 : vector<8x128xf32>
    %50 = math.tanh %49 : vector<8x128xf32>
    %51 = arith.mulf %44, %50 : vector<8x128xf32>
    %52 = arith.index_cast %29 : i32 to index
    %c0_14 = arith.constant 0 : index
    %53 = vector.load %arg9[%52, %c0_14] : memref<64x128xf32, #tpu.memory_space<vmem>>, vector<8x128xf32>
    tpu.vector_store %arg9[%52, %c0_14], %51 {strides = array<i32>} : memref<64x128xf32, #tpu.memory_space<vmem>>, vector<8x128xf32>,
    %c2_i32 = arith.constant 2 : i32
    %c8_i32_15 = arith.constant 8 : i32
    %54 = arith.muli %c2_i32, %c8_i32_15 : i32
    %55 = tpu.assume_multiple %54, 8 : i32
    %56 = arith.index_cast %55 : i32 to index
    %c0_16 = arith.constant 0 : index
    %57 = vector.load %arg0[%56, %c0_16] : memref<64x512xf32, #tpu.memory_space<vmem>>, vector<8x512xf32>
    %58 = arith.truncf %51 : vector<8x128xf32> to vector<8x128xbf16>
    %c0_17 = arith.constant 0 : index
    %c0_18 = arith.constant 0 : index
    %59 = vector.load %arg1[%c0_17, %c0_18] : memref<128x512xbf16, #tpu.memory_space<vmem>>, vector<128x512xbf16>
    %cst_19 = arith.constant dense<0.000000e+00> : vector<8x512xf32>
    %60 = tpu.matmul %58, %59, %cst_19 {dimension_numbers = #tpu.dot_dimension_numbers<[1], [0], [0], [1], [0, 0, 1, 1], [], []>} : vector<8x128xbf16>, vector<128x512xbf16>, vector<8x512xf32> -> vector<8x512xf32>
    %61 = arith.addf %57, %60 : vector<8x512xf32>
    %62 = vector.extract_strided_slice %61 {offsets = [0, 0], sizes = [8, 384], strides = [1, 1]} : vector<8x512xf32> to vector<8x384xf32>
    %63 = arith.negf %62 : vector<8x384xf32>
    %64 = math.exp %63 : vector<8x384xf32>
    %cst_20 = arith.constant 1.000000e+00 : f32
    %65 = vector.broadcast %cst_20 : f32 to vector<8x384xf32>
    %66 = arith.addf %65, %64 : vector<8x384xf32>
    %67 = arith.divf %65, %66 : vector<8x384xf32>
    %68 = vector.extract_strided_slice %67 {offsets = [0, 0], sizes = [8, 128], strides = [1, 1]} : vector<8x384xf32> to vector<8x128xf32>
    %69 = vector.extract_strided_slice %67 {offsets = [0, 128], sizes = [8, 128], strides = [1, 1]} : vector<8x384xf32> to vector<8x128xf32>
    %70 = vector.extract_strided_slice %67 {offsets = [0, 256], sizes = [8, 128], strides = [1, 1]} : vector<8x384xf32> to vector<8x128xf32>
    %71 = vector.extract_strided_slice %61 {offsets = [0, 384], sizes = [8, 128], strides = [1, 1]} : vector<8x512xf32> to vector<8x128xf32>
    %72 = math.tanh %71 : vector<8x128xf32>
    %73 = arith.mulf %69, %49 : vector<8x128xf32>
    %74 = arith.mulf %68, %72 : vector<8x128xf32>
    %75 = arith.addf %73, %74 : vector<8x128xf32>
    %76 = math.tanh %75 : vector<8x128xf32>
    %77 = arith.mulf %70, %76 : vector<8x128xf32>
    %78 = arith.index_cast %55 : i32 to index
    %c0_21 = arith.constant 0 : index
    %79 = vector.load %arg9[%78, %c0_21] : memref<64x128xf32, #tpu.memory_space<vmem>>, vector<8x128xf32>
    tpu.vector_store %arg9[%78, %c0_21], %77 {strides = array<i32>} : memref<64x128xf32, #tpu.memory_space<vmem>>, vector<8x128xf32>,
    %c3_i32 = arith.constant 3 : i32
    %c8_i32_22 = arith.constant 8 : i32
    %80 = arith.muli %c3_i32, %c8_i32_22 : i32
    %81 = tpu.assume_multiple %80, 8 : i32
    %82 = arith.index_cast %81 : i32 to index
    %c0_23 = arith.constant 0 : index
    %83 = vector.load %arg0[%82, %c0_23] : memref<64x512xf32, #tpu.memory_space<vmem>>, vector<8x512xf32>
    %84 = arith.truncf %77 : vector<8x128xf32> to vector<8x128xbf16>
    %c0_24 = arith.constant 0 : index
    %c0_25 = arith.constant 0 : index
    %85 = vector.load %arg1[%c0_24, %c0_25] : memref<128x512xbf16, #tpu.memory_space<vmem>>, vector<128x512xbf16>
    %cst_26 = arith.constant dense<0.000000e+00> : vector<8x512xf32>
    %86 = tpu.matmul %84, %85, %cst_26 {dimension_numbers = #tpu.dot_dimension_numbers<[1], [0], [0], [1], [0, 0, 1, 1], [], []>} : vector<8x128xbf16>, vector<128x512xbf16>, vector<8x512xf32> -> vector<8x512xf32>
    %87 = arith.addf %83, %86 : vector<8x512xf32>
    %88 = vector.extract_strided_slice %87 {offsets = [0, 0], sizes = [8, 384], strides = [1, 1]} : vector<8x512xf32> to vector<8x384xf32>
    %89 = arith.negf %88 : vector<8x384xf32>
    %90 = math.exp %89 : vector<8x384xf32>
    %cst_27 = arith.constant 1.000000e+00 : f32
    %91 = vector.broadcast %cst_27 : f32 to vector<8x384xf32>
    %92 = arith.addf %91, %90 : vector<8x384xf32>
    %93 = arith.divf %91, %92 : vector<8x384xf32>
    %94 = vector.extract_strided_slice %93 {offsets = [0, 0], sizes = [8, 128], strides = [1, 1]} : vector<8x384xf32> to vector<8x128xf32>
    %95 = vector.extract_strided_slice %93 {offsets = [0, 128], sizes = [8, 128], strides = [1, 1]} : vector<8x384xf32> to vector<8x128xf32>
    %96 = vector.extract_strided_slice %93 {offsets = [0, 256], sizes = [8, 128], strides = [1, 1]} : vector<8x384xf32> to vector<8x128xf32>
    %97 = vector.extract_strided_slice %87 {offsets = [0, 384], sizes = [8, 128], strides = [1, 1]} : vector<8x512xf32> to vector<8x128xf32>
    %98 = math.tanh %97 : vector<8x128xf32>
    %99 = arith.mulf %95, %75 : vector<8x128xf32>
    %100 = arith.mulf %94, %98 : vector<8x128xf32>
    %101 = arith.addf %99, %100 : vector<8x128xf32>
    %102 = math.tanh %101 : vector<8x128xf32>
    %103 = arith.mulf %96, %102 : vector<8x128xf32>
    %104 = arith.index_cast %81 : i32 to index
    %c0_28 = arith.constant 0 : index
    %105 = vector.load %arg9[%104, %c0_28] : memref<64x128xf32, #tpu.memory_space<vmem>>, vector<8x128xf32>
    tpu.vector_store %arg9[%104, %c0_28], %103 {strides = array<i32>} : memref<64x128xf32, #tpu.memory_space<vmem>>, vector<8x128xf32>,
    %c4_i32 = arith.constant 4 : i32
    %c8_i32_29 = arith.constant 8 : i32
    %106 = arith.muli %c4_i32, %c8_i32_29 : i32
    %107 = tpu.assume_multiple %106, 8 : i32
    %108 = arith.index_cast %107 : i32 to index
    %c0_30 = arith.constant 0 : index
    %109 = vector.load %arg0[%108, %c0_30] : memref<64x512xf32, #tpu.memory_space<vmem>>, vector<8x512xf32>
    %110 = arith.truncf %103 : vector<8x128xf32> to vector<8x128xbf16>
    %c0_31 = arith.constant 0 : index
    %c0_32 = arith.constant 0 : index
    %111 = vector.load %arg1[%c0_31, %c0_32] : memref<128x512xbf16, #tpu.memory_space<vmem>>, vector<128x512xbf16>
    %cst_33 = arith.constant dense<0.000000e+00> : vector<8x512xf32>
    %112 = tpu.matmul %110, %111, %cst_33 {dimension_numbers = #tpu.dot_dimension_numbers<[1], [0], [0], [1], [0, 0, 1, 1], [], []>} : vector<8x128xbf16>, vector<128x512xbf16>, vector<8x512xf32> -> vector<8x512xf32>
    %113 = arith.addf %109, %112 : vector<8x512xf32>
    %114 = vector.extract_strided_slice %113 {offsets = [0, 0], sizes = [8, 384], strides = [1, 1]} : vector<8x512xf32> to vector<8x384xf32>
    %115 = arith.negf %114 : vector<8x384xf32>
    %116 = math.exp %115 : vector<8x384xf32>
    %cst_34 = arith.constant 1.000000e+00 : f32
    %117 = vector.broadcast %cst_34 : f32 to vector<8x384xf32>
    %118 = arith.addf %117, %116 : vector<8x384xf32>
    %119 = arith.divf %117, %118 : vector<8x384xf32>
    %120 = vector.extract_strided_slice %119 {offsets = [0, 0], sizes = [8, 128], strides = [1, 1]} : vector<8x384xf32> to vector<8x128xf32>
    %121 = vector.extract_strided_slice %119 {offsets = [0, 128], sizes = [8, 128], strides = [1, 1]} : vector<8x384xf32> to vector<8x128xf32>
    %122 = vector.extract_strided_slice %119 {offsets = [0, 256], sizes = [8, 128], strides = [1, 1]} : vector<8x384xf32> to vector<8x128xf32>
    %123 = vector.extract_strided_slice %113 {offsets = [0, 384], sizes = [8, 128], strides = [1, 1]} : vector<8x512xf32> to vector<8x128xf32>
    %124 = math.tanh %123 : vector<8x128xf32>
    %125 = arith.mulf %121, %101 : vector<8x128xf32>
    %126 = arith.mulf %120, %124 : vector<8x128xf32>
    %127 = arith.addf %125, %126 : vector<8x128xf32>
    %128 = math.tanh %127 : vector<8x128xf32>
    %129 = arith.mulf %122, %128 : vector<8x128xf32>
    %130 = arith.index_cast %107 : i32 to index
    %c0_35 = arith.constant 0 : index
    %131 = vector.load %arg9[%130, %c0_35] : memref<64x128xf32, #tpu.memory_space<vmem>>, vector<8x128xf32>
    tpu.vector_store %arg9[%130, %c0_35], %129 {strides = array<i32>} : memref<64x128xf32, #tpu.memory_space<vmem>>, vector<8x128xf32>,
    %c5_i32 = arith.constant 5 : i32
    %c8_i32_36 = arith.constant 8 : i32
    %132 = arith.muli %c5_i32, %c8_i32_36 : i32
    %133 = tpu.assume_multiple %132, 8 : i32
    %134 = arith.index_cast %133 : i32 to index
    %c0_37 = arith.constant 0 : index
    %135 = vector.load %arg0[%134, %c0_37] : memref<64x512xf32, #tpu.memory_space<vmem>>, vector<8x512xf32>
    %136 = arith.truncf %129 : vector<8x128xf32> to vector<8x128xbf16>
    %c0_38 = arith.constant 0 : index
    %c0_39 = arith.constant 0 : index
    %137 = vector.load %arg1[%c0_38, %c0_39] : memref<128x512xbf16, #tpu.memory_space<vmem>>, vector<128x512xbf16>
    %cst_40 = arith.constant dense<0.000000e+00> : vector<8x512xf32>
    %138 = tpu.matmul %136, %137, %cst_40 {dimension_numbers = #tpu.dot_dimension_numbers<[1], [0], [0], [1], [0, 0, 1, 1], [], []>} : vector<8x128xbf16>, vector<128x512xbf16>, vector<8x512xf32> -> vector<8x512xf32>
    %139 = arith.addf %135, %138 : vector<8x512xf32>
    %140 = vector.extract_strided_slice %139 {offsets = [0, 0], sizes = [8, 384], strides = [1, 1]} : vector<8x512xf32> to vector<8x384xf32>
    %141 = arith.negf %140 : vector<8x384xf32>
    %142 = math.exp %141 : vector<8x384xf32>
    %cst_41 = arith.constant 1.000000e+00 : f32
    %143 = vector.broadcast %cst_41 : f32 to vector<8x384xf32>
    %144 = arith.addf %143, %142 : vector<8x384xf32>
    %145 = arith.divf %143, %144 : vector<8x384xf32>
    %146 = vector.extract_strided_slice %145 {offsets = [0, 0], sizes = [8, 128], strides = [1, 1]} : vector<8x384xf32> to vector<8x128xf32>
    %147 = vector.extract_strided_slice %145 {offsets = [0, 128], sizes = [8, 128], strides = [1, 1]} : vector<8x384xf32> to vector<8x128xf32>
    %148 = vector.extract_strided_slice %145 {offsets = [0, 256], sizes = [8, 128], strides = [1, 1]} : vector<8x384xf32> to vector<8x128xf32>
    %149 = vector.extract_strided_slice %139 {offsets = [0, 384], sizes = [8, 128], strides = [1, 1]} : vector<8x512xf32> to vector<8x128xf32>
    %150 = math.tanh %149 : vector<8x128xf32>
    %151 = arith.mulf %147, %127 : vector<8x128xf32>
    %152 = arith.mulf %146, %150 : vector<8x128xf32>
    %153 = arith.addf %151, %152 : vector<8x128xf32>
    %154 = math.tanh %153 : vector<8x128xf32>
    %155 = arith.mulf %148, %154 : vector<8x128xf32>
    %156 = arith.index_cast %133 : i32 to index
    %c0_42 = arith.constant 0 : index
    %157 = vector.load %arg9[%156, %c0_42] : memref<64x128xf32, #tpu.memory_space<vmem>>, vector<8x128xf32>
    tpu.vector_store %arg9[%156, %c0_42], %155 {strides = array<i32>} : memref<64x128xf32, #tpu.memory_space<vmem>>, vector<8x128xf32>,
    %c6_i32 = arith.constant 6 : i32
    %c8_i32_43 = arith.constant 8 : i32
    %158 = arith.muli %c6_i32, %c8_i32_43 : i32
    %159 = tpu.assume_multiple %158, 8 : i32
    %160 = arith.index_cast %159 : i32 to index
    %c0_44 = arith.constant 0 : index
    %161 = vector.load %arg0[%160, %c0_44] : memref<64x512xf32, #tpu.memory_space<vmem>>, vector<8x512xf32>
    %162 = arith.truncf %155 : vector<8x128xf32> to vector<8x128xbf16>
    %c0_45 = arith.constant 0 : index
    %c0_46 = arith.constant 0 : index
    %163 = vector.load %arg1[%c0_45, %c0_46] : memref<128x512xbf16, #tpu.memory_space<vmem>>, vector<128x512xbf16>
    %cst_47 = arith.constant dense<0.000000e+00> : vector<8x512xf32>
    %164 = tpu.matmul %162, %163, %cst_47 {dimension_numbers = #tpu.dot_dimension_numbers<[1], [0], [0], [1], [0, 0, 1, 1], [], []>} : vector<8x128xbf16>, vector<128x512xbf16>, vector<8x512xf32> -> vector<8x512xf32>
    %165 = arith.addf %161, %164 : vector<8x512xf32>
    %166 = vector.extract_strided_slice %165 {offsets = [0, 0], sizes = [8, 384], strides = [1, 1]} : vector<8x512xf32> to vector<8x384xf32>
    %167 = arith.negf %166 : vector<8x384xf32>
    %168 = math.exp %167 : vector<8x384xf32>
    %cst_48 = arith.constant 1.000000e+00 : f32
    %169 = vector.broadcast %cst_48 : f32 to vector<8x384xf32>
    %170 = arith.addf %169, %168 : vector<8x384xf32>
    %171 = arith.divf %169, %170 : vector<8x384xf32>
    %172 = vector.extract_strided_slice %171 {offsets = [0, 0], sizes = [8, 128], strides = [1, 1]} : vector<8x384xf32> to vector<8x128xf32>
    %173 = vector.extract_strided_slice %171 {offsets = [0, 128], sizes = [8, 128], strides = [1, 1]} : vector<8x384xf32> to vector<8x128xf32>
    %174 = vector.extract_strided_slice %171 {offsets = [0, 256], sizes = [8, 128], strides = [1, 1]} : vector<8x384xf32> to vector<8x128xf32>
    %175 = vector.extract_strided_slice %165 {offsets = [0, 384], sizes = [8, 128], strides = [1, 1]} : vector<8x512xf32> to vector<8x128xf32>
    %176 = math.tanh %175 : vector<8x128xf32>
    %177 = arith.mulf %173, %153 : vector<8x128xf32>
    %178 = arith.mulf %172, %176 : vector<8x128xf32>
    %179 = arith.addf %177, %178 : vector<8x128xf32>
    %180 = math.tanh %179 : vector<8x128xf32>
    %181 = arith.mulf %174, %180 : vector<8x128xf32>
    %182 = arith.index_cast %159 : i32 to index
    %c0_49 = arith.constant 0 : index
    %183 = vector.load %arg9[%182, %c0_49] : memref<64x128xf32, #tpu.memory_space<vmem>>, vector<8x128xf32>
    tpu.vector_store %arg9[%182, %c0_49], %181 {strides = array<i32>} : memref<64x128xf32, #tpu.memory_space<vmem>>, vector<8x128xf32>,
    %c7_i32 = arith.constant 7 : i32
    %c8_i32_50 = arith.constant 8 : i32
    %184 = arith.muli %c7_i32, %c8_i32_50 : i32
    %185 = tpu.assume_multiple %184, 8 : i32
    %186 = arith.index_cast %185 : i32 to index
    %c0_51 = arith.constant 0 : index
    %187 = vector.load %arg0[%186, %c0_51] : memref<64x512xf32, #tpu.memory_space<vmem>>, vector<8x512xf32>
    %188 = arith.truncf %181 : vector<8x128xf32> to vector<8x128xbf16>
    %c0_52 = arith.constant 0 : index
    %c0_53 = arith.constant 0 : index
    %189 = vector.load %arg1[%c0_52, %c0_53] : memref<128x512xbf16, #tpu.memory_space<vmem>>, vector<128x512xbf16>
    %cst_54 = arith.constant dense<0.000000e+00> : vector<8x512xf32>
    %190 = tpu.matmul %188, %189, %cst_54 {dimension_numbers = #tpu.dot_dimension_numbers<[1], [0], [0], [1], [0, 0, 1, 1], [], []>} : vector<8x128xbf16>, vector<128x512xbf16>, vector<8x512xf32> -> vector<8x512xf32>
    %191 = arith.addf %187, %190 : vector<8x512xf32>
    %192 = vector.extract_strided_slice %191 {offsets = [0, 0], sizes = [8, 384], strides = [1, 1]} : vector<8x512xf32> to vector<8x384xf32>
    %193 = arith.negf %192 : vector<8x384xf32>
    %194 = math.exp %193 : vector<8x384xf32>
    %cst_55 = arith.constant 1.000000e+00 : f32
    %195 = vector.broadcast %cst_55 : f32 to vector<8x384xf32>
    %196 = arith.addf %195, %194 : vector<8x384xf32>
    %197 = arith.divf %195, %196 : vector<8x384xf32>
    %198 = vector.extract_strided_slice %197 {offsets = [0, 0], sizes = [8, 128], strides = [1, 1]} : vector<8x384xf32> to vector<8x128xf32>
    %199 = vector.extract_strided_slice %197 {offsets = [0, 128], sizes = [8, 128], strides = [1, 1]} : vector<8x384xf32> to vector<8x128xf32>
    %200 = vector.extract_strided_slice %197 {offsets = [0, 256], sizes = [8, 128], strides = [1, 1]} : vector<8x384xf32> to vector<8x128xf32>
    %201 = vector.extract_strided_slice %191 {offsets = [0, 384], sizes = [8, 128], strides = [1, 1]} : vector<8x512xf32> to vector<8x128xf32>
    %202 = math.tanh %201 : vector<8x128xf32>
    %203 = arith.mulf %199, %179 : vector<8x128xf32>
    %204 = arith.mulf %198, %202 : vector<8x128xf32>
    %205 = arith.addf %203, %204 : vector<8x128xf32>
    %206 = math.tanh %205 : vector<8x128xf32>
    %207 = arith.mulf %200, %206 : vector<8x128xf32>
    %208 = arith.index_cast %185 : i32 to index
    %c0_56 = arith.constant 0 : index
    %209 = vector.load %arg9[%208, %c0_56] : memref<64x128xf32, #tpu.memory_space<vmem>>, vector<8x128xf32>
    tpu.vector_store %arg9[%208, %c0_56], %207 {strides = array<i32>} : memref<64x128xf32, #tpu.memory_space<vmem>>, vector<8x128xf32>,
    %c8_i32_57 = arith.constant 8 : i32
    %c0_58 = arith.constant 0 : index
    %c0_59 = arith.constant 0 : index
    %210 = vector.load %arg7[%c0_58, %c0_59] : memref<8x128xf32, #tpu.memory_space<vmem>>, vector<8x128xf32>
    tpu.vector_store %arg7[%c0_58, %c0_59], %207 {strides = array<i32>} : memref<8x128xf32, #tpu.memory_space<vmem>>, vector<8x128xf32>,
    %c0_60 = arith.constant 0 : index
    %c0_61 = arith.constant 0 : index
    %211 = vector.load %arg8[%c0_60, %c0_61] : memref<8x128xf32, #tpu.memory_space<vmem>>, vector<8x128xf32>
    tpu.vector_store %arg8[%c0_60, %c0_61], %205 {strides = array<i32>} : memref<8x128xf32, #tpu.memory_space<vmem>>, vector<8x128xf32>,
    %c0_62 = arith.constant 0 : index
    %c0_63 = arith.constant 0 : index
    %212 = vector.load %arg9[%c0_62, %c0_63] : memref<64x128xf32, #tpu.memory_space<vmem>>, vector<64x128xf32>
    %c0_64 = arith.constant 0 : index
    %c0_65 = arith.constant 0 : index
    %213 = vector.load %arg2[%c0_64, %c0_65] : memref<128x128xf32, #tpu.memory_space<vmem>>, vector<128x128xf32>
    %cst_66 = arith.constant dense<0.000000e+00> : vector<64x128xf32>
    %214 = tpu.matmul %212, %213, %cst_66 {dimension_numbers = #tpu.dot_dimension_numbers<[1], [0], [0], [1], [0, 0, 1, 1], [], []>} : vector<64x128xf32>, vector<128x128xf32>, vector<64x128xf32> -> vector<64x128xf32>
    %c0_67 = arith.constant 0 : index
    %c0_68 = arith.constant 0 : index
    %215 = vector.load %arg3[%c0_67, %c0_68] : memref<1x128xf32, #tpu.memory_space<vmem>>, vector<1x128xf32>
    %216 = vector.broadcast %215 : vector<1x128xf32> to vector<64x128xf32>
    %217 = arith.addf %214, %216 : vector<64x128xf32>
    %c0_69 = arith.constant 0 : index
    %c0_70 = arith.constant 0 : index
    %218 = vector.load %arg6[%c0_69, %c0_70] : memref<64x128xf32, #tpu.memory_space<vmem>>, vector<64x128xf32>
    tpu.vector_store %arg6[%c0_69, %c0_70], %217 {strides = array<i32>} : memref<64x128xf32, #tpu.memory_space<vmem>>, vector<64x128xf32>,
    return
  }
}

</mosaic_0001>

<llo_original>
// kernel: lstm_forward.1
$region0: #{lstm_forward.1}
  #allocation0 [shape = 'u32[]', space=smem, size = 0x4, offset = 0x4, fixed_abs, tag = 'smem constant byte address 0x4 - core index']
  #allocation1 [shape = 'u32[72,128]{1,0:T(1,128)}', space=vmem, size = 0x9000, scoped, tag = 'internal scratch']
  #allocation2 [shape = 'f32[64,128]{1,0:T(8,128)}', space=vmem, size = 0x8000, scoped, tag = 'scratch operand']
  %s0 = inlined_call_operand.vmem [shape: f32[64,512], index: 0, kind: input, shape index: {}]
  %s1 = inlined_call_operand.vmem [shape: bf16[128,512], index: 1, kind: input, shape index: {}]
  %s2 = inlined_call_operand.vmem [shape: f32[128,128], index: 2, kind: input, shape index: {}]
  %s3 = inlined_call_operand.vmem [shape: f32[1,128], index: 3, kind: input, shape index: {}]
  %s4 = inlined_call_operand.vmem [shape: f32[8,128], index: 4, kind: input, shape index: {}, may-alias: {4,7}]
  %s5 = inlined_call_operand.vmem [shape: f32[8,128], index: 5, kind: input, shape index: {}, may-alias: {5,8}]
  %s6 = inlined_call_operand.vmem [shape: f32[64,128], index: 6, kind: output, shape index: {0}]
  %s7 = inlined_call_operand.vmem [shape: f32[8,128], index: 7, kind: output, shape index: {1}, may-alias: {4,7}]
  %s8 = inlined_call_operand.vmem [shape: f32[8,128], index: 8, kind: output, shape index: {2}, may-alias: {5,8}]
  %9 = xla_tuple %s6, %s7, %s8
  %s10 = sld [smem:[#allocation0]]
  $region50: #{lstm_forward.1} parent=0
    _
  %s12 = ssub.s32 1, %s10
  %s13 = scalar_select 0, %s12, %s10
  // Predicated region
  $region2: #{lstm_forward.1} parent=0 // pred_check
    _
  $region3: #{lstm_forward.1} parent=0 // pred_check_branch
    %15 = sbr.rel (0) target = $region5
  $region4: #{lstm_forward.1} parent=0 // pred_region
    _
  $region5: #{lstm_forward.1} parent=0 // pred_fallthru
    _
  // Predicated region
  $region6: #{lstm_forward.1} parent=0 // pred_check
    _
  $region7: #{lstm_forward.1} parent=0 // pred_check_branch
    %17 = sbr.rel (0) target = $region9
  $region8: #{lstm_forward.1} parent=0 // pred_region
    _
  $region9: #{lstm_forward.1} parent=0 // pred_fallthru
    _
  // Predicated region
  $region10: #{lstm_forward.1} parent=0 // pred_check
    _
  $region11: #{lstm_forward.1} parent=0 // pred_check_branch
    %19 = sbr.rel (0) target = $region13
  $region12: #{lstm_forward.1} parent=0 // pred_region
    _
  $region13: #{lstm_forward.1} parent=0 // pred_fallthru
    _
  // Predicated region
  $region14: #{lstm_forward.1} parent=0 // pred_check
    _
  $region15: #{lstm_forward.1} parent=0 // pred_check_branch
    %21 = sbr.rel (0) target = $region17
  $region16: #{lstm_forward.1} parent=0 // pred_region
    _
  $region17: #{lstm_forward.1} parent=0 // pred_fallthru
    _
  // Predicated region
  $region18: #{lstm_forward.1} parent=0 // pred_check
    _
  $region19: #{lstm_forward.1} parent=0 // pred_check_branch
    %23 = sbr.rel (0) target = $region21
  $region20: #{lstm_forward.1} parent=0 // pred_region
    _
  $region21: #{lstm_forward.1} parent=0 // pred_fallthru
    _
  // Predicated region
  $region22: #{lstm_forward.1} parent=0 // pred_check
    _
  $region23: #{lstm_forward.1} parent=0 // pred_check_branch
    %25 = sbr.rel (0) target = $region25
  $region24: #{lstm_forward.1} parent=0 // pred_region
    _
  $region25: #{lstm_forward.1} parent=0 // pred_fallthru
    _
  %v26 = vld [vmem:[%s4] sm:$0xff]
  %v27 = vld [vmem:[%s5] sm:$0xff]
  %s28 = smul.u32 0, 4
  %s29 = smul.addr %s28, 8
  %s30 = scalar_lea.vmem %s0, %s29
  %v31 = vld [vmem:[%s30] sm:$0xff]
  %v32 = vld [vmem:[%s30 + $0x8] sm:$0xff]
  %v33 = vld [vmem:[%s30 + $0x10] sm:$0xff]
  %v34 = vld [vmem:[%s30 + $0x18] sm:$0xff]
  %v35 = vpack.c.bf16 %v26, %v26
  %v36 = vld [vmem:[%s1] sm:$0xff]
  %v37 = vld [vmem:[%s1 + $0x8] sm:$0xff]
  %v38 = vld [vmem:[%s1 + $0x10] sm:$0xff]
  %v39 = vld [vmem:[%s1 + $0x18] sm:$0xff]
  %v40 = vld [vmem:[%s1 + $0x20] sm:$0xff]
  %v41 = vld [vmem:[%s1 + $0x28] sm:$0xff]
  %v42 = vld [vmem:[%s1 + $0x30] sm:$0xff]
  %v43 = vld [vmem:[%s1 + $0x38] sm:$0xff]
  %v44 = vld [vmem:[%s1 + $0x40] sm:$0xff]
  %v45 = vld [vmem:[%s1 + $0x48] sm:$0xff]
  %v46 = vld [vmem:[%s1 + $0x50] sm:$0xff]
  %v47 = vld [vmem:[%s1 + $0x58] sm:$0xff]
  %v48 = vld [vmem:[%s1 + $0x60] sm:$0xff]
  %v49 = vld [vmem:[%s1 + $0x68] sm:$0xff]
  %v50 = vld [vmem:[%s1 + $0x70] sm:$0xff]
  %v51 = vld [vmem:[%s1 + $0x78] sm:$0xff]
  %v52 = vld [vmem:[%s1 + $0x80] sm:$0xff]
  %v53 = vld [vmem:[%s1 + $0x88] sm:$0xff]
  %v54 = vld [vmem:[%s1 + $0x90] sm:$0xff]
  %v55 = vld [vmem:[%s1 + $0x98] sm:$0xff]
  %v56 = vld [vmem:[%s1 + $0xa0] sm:$0xff]
  %v57 = vld [vmem:[%s1 + $0xa8] sm:$0xff]
  %v58 = vld [vmem:[%s1 + $0xb0] sm:$0xff]
  %v59 = vld [vmem:[%s1 + $0xb8] sm:$0xff]
  %v60 = vld [vmem:[%s1 + $0xc0] sm:$0xff]
  %v61 = vld [vmem:[%s1 + $0xc8] sm:$0xff]
  %v62 = vld [vmem:[%s1 + $0xd0] sm:$0xff]
  %v63 = vld [vmem:[%s1 + $0xd8] sm:$0xff]
  %v64 = vld [vmem:[%s1 + $0xe0] sm:$0xff]
  %v65 = vld [vmem:[%s1 + $0xe8] sm:$0xff]
  %v66 = vld [vmem:[%s1 + $0xf0] sm:$0xff]
  %v67 = vld [vmem:[%s1 + $0xf8] sm:$0xff]
  %v100 = vunpack.c.l.b16 %v36
  %v101 = vunpack.c.h.b16 %v36
  %v102 = vunpack.c.l.b16 %v37
  %v103 = vunpack.c.h.b16 %v37
  %v104 = vunpack.c.l.b16 %v38
  %v105 = vunpack.c.h.b16 %v38
  %v106 = vunpack.c.l.b16 %v39
  %v107 = vunpack.c.h.b16 %v39
  %v108 = vunpack.c.l.b16 %v40
  %v109 = vunpack.c.h.b16 %v40
  %v110 = vunpack.c.l.b16 %v41
  %v111 = vunpack.c.h.b16 %v41
  %v112 = vunpack.c.l.b16 %v42
  %v113 = vunpack.c.h.b16 %v42
  %v114 = vunpack.c.l.b16 %v43
  %v115 = vunpack.c.h.b16 %v43
  %v116 = vunpack.c.l.b16 %v44
  %v117 = vunpack.c.h.b16 %v44
  %v118 = vunpack.c.l.b16 %v45
  %v119 = vunpack.c.h.b16 %v45
  %v120 = vunpack.c.l.b16 %v46
  %v121 = vunpack.c.h.b16 %v46
  %v122 = vunpack.c.l.b16 %v47
  %v123 = vunpack.c.h.b16 %v47
  %v124 = vunpack.c.l.b16 %v48
  %v125 = vunpack.c.h.b16 %v48
  %v126 = vunpack.c.l.b16 %v49
  %v127 = vunpack.c.h.b16 %v49
  %v128 = vunpack.c.l.b16 %v50
  %v129 = vunpack.c.h.b16 %v50
  %v130 = vunpack.c.l.b16 %v51
  %v131 = vunpack.c.h.b16 %v51
  %v132 = vunpack.c.l.b16 %v52
  %v133 = vunpack.c.h.b16 %v52
  %v134 = vunpack.c.l.b16 %v53
  %v135 = vunpack.c.h.b16 %v53
  %v136 = vunpack.c.l.b16 %v54
  %v137 = vunpack.c.h.b16 %v54
  %v138 = vunpack.c.l.b16 %v55
  %v139 = vunpack.c.h.b16 %v55
  %v140 = vunpack.c.l.b16 %v56
  %v141 = vunpack.c.h.b16 %v56
  %v142 = vunpack.c.l.b16 %v57
  %v143 = vunpack.c.h.b16 %v57
  %v144 = vunpack.c.l.b16 %v58
  %v145 = vunpack.c.h.b16 %v58
  %v146 = vunpack.c.l.b16 %v59
  %v147 = vunpack.c.h.b16 %v59
  %v148 = vunpack.c.l.b16 %v60
  %v149 = vunpack.c.h.b16 %v60
  %v150 = vunpack.c.l.b16 %v61
  %v151 = vunpack.c.h.b16 %v61
  %v152 = vunpack.c.l.b16 %v62
  %v153 = vunpack.c.h.b16 %v62
  %v154 = vunpack.c.l.b16 %v63
  %v155 = vunpack.c.h.b16 %v63
  %v156 = vunpack.c.l.b16 %v64
  %v157 = vunpack.c.h.b16 %v64
  %v158 = vunpack.c.l.b16 %v65
  %v159 = vunpack.c.h.b16 %v65
  %v160 = vunpack.c.l.b16 %v66
  %v161 = vunpack.c.h.b16 %v66
  %v162 = vunpack.c.l.b16 %v67
  %v163 = vunpack.c.h.b16 %v67
  %v164 = vpack.c.b16 %v104, %v100
  %v165 = vpack.c.b16 %v105, %v101
  %v166 = vpack.c.b16 %v106, %v102
  %v167 = vpack.c.b16 %v107, %v103
  %v168 = vpack.c.b16 %v112, %v108
  %v169 = vpack.c.b16 %v113, %v109
  %v170 = vpack.c.b16 %v114, %v110
  %v171 = vpack.c.b16 %v115, %v111
  %v172 = vpack.c.b16 %v120, %v116
  %v173 = vpack.c.b16 %v121, %v117
  %v174 = vpack.c.b16 %v122, %v118
  %v175 = vpack.c.b16 %v123, %v119
  %v176 = vpack.c.b16 %v128, %v124
  %v177 = vpack.c.b16 %v129, %v125
  %v178 = vpack.c.b16 %v130, %v126
  %v179 = vpack.c.b16 %v131, %v127
  %v180 = vpack.c.b16 %v136, %v132
  %v181 = vpack.c.b16 %v137, %v133
  %v182 = vpack.c.b16 %v138, %v134
  %v183 = vpack.c.b16 %v139, %v135
  %v184 = vpack.c.b16 %v144, %v140
  %v185 = vpack.c.b16 %v145, %v141
  %v186 = vpack.c.b16 %v146, %v142
  %v187 = vpack.c.b16 %v147, %v143
  %v188 = vpack.c.b16 %v152, %v148
  %v189 = vpack.c.b16 %v153, %v149
  %v190 = vpack.c.b16 %v154, %v150
  %v191 = vpack.c.b16 %v155, %v151
  %v192 = vpack.c.b16 %v160, %v156
  %v193 = vpack.c.b16 %v161, %v157
  %v194 = vpack.c.b16 %v162, %v158
  %v195 = vpack.c.b16 %v163, %v159
  %228 = vmatpush.bf16.msra.mxu0 %v192
  %229 = vmatpush.bf16.msra.mxu0 %v188
  %230 = vmatpush.bf16.msra.mxu0 %v184
  %231 = vmatpush.bf16.msra.mxu0 %v180
  %232 = vmatpush.bf16.msra.mxu0 %v176
  %233 = vmatpush.bf16.msra.mxu0 %v172
  %234 = vmatpush.bf16.msra.mxu0 %v168
  %235 = vmatpush.bf16.msra.mxu0 %v164
  %236 = vmatmul.bf16.gmra.mxu0 %v35
  %v237 = vpop.f32.mrf.mxu0
  %v238 = vadd.f32 0.0, %v237
  %v239 = vpop.f32.mrf.mxu0
  %240 = vdwg.mxu0
  %241 = vmatpush.bf16.msra.mxu0 %v193
  %242 = vmatpush.bf16.msra.mxu0 %v189
  %243 = vmatpush.bf16.msra.mxu0 %v185
  %244 = vmatpush.bf16.msra.mxu0 %v181
  %245 = vmatpush.bf16.msra.mxu0 %v177
  %246 = vmatpush.bf16.msra.mxu0 %v173
  %247 = vmatpush.bf16.msra.mxu0 %v169
  %248 = vmatpush.bf16.msra.mxu0 %v165
  %249 = vmatmul.bf16.gmra.mxu0 %v35
  %v250 = vpop.f32.mrf.mxu0
  %v251 = vadd.f32 0.0, %v250
  %v252 = vpop.f32.mrf.mxu0
  %253 = vdwg.mxu0
  %254 = vmatpush.bf16.msra.mxu0 %v194
  %255 = vmatpush.bf16.msra.mxu0 %v190
  %256 = vmatpush.bf16.msra.mxu0 %v186
  %257 = vmatpush.bf16.msra.mxu0 %v182
  %258 = vmatpush.bf16.msra.mxu0 %v178
  %259 = vmatpush.bf16.msra.mxu0 %v174
  %260 = vmatpush.bf16.msra.mxu0 %v170
  %261 = vmatpush.bf16.msra.mxu0 %v166
  %262 = vmatmul.bf16.gmra.mxu0 %v35
  %v263 = vpop.f32.mrf.mxu0
  %v264 = vadd.f32 0.0, %v263
  %v265 = vpop.f32.mrf.mxu0
  %266 = vdwg.mxu0
  %267 = vmatpush.bf16.msra.mxu0 %v195
  %268 = vmatpush.bf16.msra.mxu0 %v191
  %269 = vmatpush.bf16.msra.mxu0 %v187
  %270 = vmatpush.bf16.msra.mxu0 %v183
  %271 = vmatpush.bf16.msra.mxu0 %v179
  %272 = vmatpush.bf16.msra.mxu0 %v175
  %273 = vmatpush.bf16.msra.mxu0 %v171
  %274 = vmatpush.bf16.msra.mxu0 %v167
  %275 = vmatmul.bf16.gmra.mxu0 %v35
  %v276 = vpop.f32.mrf.mxu0
  %v277 = vadd.f32 0.0, %v276
  %v278 = vpop.f32.mrf.mxu0
  %279 = vdwg.mxu0
  %v280 = vadd.f32 %v31, %v238
  %v281 = vadd.f32 %v32, %v251
  %v282 = vadd.f32 %v33, %v264
  %v283 = vadd.f32 %v34, %v277
  %v284 = vxor.u32 %v280, 2147483648
  %v285 = vxor.u32 %v281, 2147483648
  %v286 = vxor.u32 %v282, 2147483648
  %v287 = vmul.f32 %v284, 1.442695
  %v288 = vpow.pop %v287
  %v289 = vmul.f32 %v285, 1.442695
  %v290 = vpow.pop %v289
  %v291 = vmul.f32 %v286, 1.442695
  %v292 = vpow.pop %v291
  %v293 = vadd.f32 %v288, 1.0
  %v294 = vadd.f32 %v290, 1.0
  %v295 = vadd.f32 %v292, 1.0
  %v296 = vrcp.pop %v293
  %v297 = vmul.f32 %v293, %v296
  %v298 = vsub.f32 1.0, %v297
  %v299 = vmul.f32 %v296, %v298
  %v300 = vadd.f32 %v296, %v299
  %vm301 = vweird.f32 %v293
  %vm302 = vweird.f32 %v296
  %vm303 = vmor %vm301, %vm302
  %v304 = vsel %vm303, %v296, %v300
  %v305 = vand.u32 2147483647, %v293
  %vm306 = vcmp.eq.f32.partialorder %v305, 8.507059e+37
  %v307 = vand.u32 %v293, 2147483648
  %v308 = vor.u32 1.1754944e-38, %v307
  %v309 = vsel %vm306, %v308, %v304
  %v310 = vmul.f32 1.0, %v309
  %v311 = vrcp.pop %v294
  %v312 = vmul.f32 %v294, %v311
  %v313 = vsub.f32 1.0, %v312
  %v314 = vmul.f32 %v311, %v313
  %v315 = vadd.f32 %v311, %v314
  %vm316 = vweird.f32 %v294
  %vm317 = vweird.f32 %v311
  %vm318 = vmor %vm316, %vm317
  %v319 = vsel %vm318, %v311, %v315
  %v320 = vand.u32 2147483647, %v294
  %vm321 = vcmp.eq.f32.partialorder %v320, 8.507059e+37
  %v322 = vand.u32 %v294, 2147483648
  %v323 = vor.u32 1.1754944e-38, %v322
  %v324 = vsel %vm321, %v323, %v319
  %v325 = vmul.f32 1.0, %v324
  %v326 = vrcp.pop %v295
  %v327 = vmul.f32 %v295, %v326
  %v328 = vsub.f32 1.0, %v327
  %v329 = vmul.f32 %v326, %v328
  %v330 = vadd.f32 %v326, %v329
  %vm331 = vweird.f32 %v295
  %vm332 = vweird.f32 %v326
  %vm333 = vmor %vm331, %vm332
  %v334 = vsel %vm333, %v326, %v330
  %v335 = vand.u32 2147483647, %v295
  %vm336 = vcmp.eq.f32.partialorder %v335, 8.507059e+37
  %v337 = vand.u32 %v295, 2147483648
  %v338 = vor.u32 1.1754944e-38, %v337
  %v339 = vsel %vm336, %v338, %v334
  %v340 = vmul.f32 1.0, %v339
  %v341 = vtanh.pop %v283
  %v342 = vmul.f32 %v325, %v27
  %v343 = vmul.f32 %v310, %v341
  %v344 = vadd.f32 %v342, %v343
  %v345 = vtanh.pop %v344
  %v346 = vmul.f32 %v340, %v345
  %347 = vst [vmem:[#allocation2] sm:$0xff] %v346
  %s348 = smul.u32 1, 4
  %s349 = smul.addr %s348, 8
  %s350 = scalar_lea.vmem %s0, %s349
  %v351 = vld [vmem:[%s350] sm:$0xff]
  %v352 = vld [vmem:[%s350 + $0x8] sm:$0xff]
  %v353 = vld [vmem:[%s350 + $0x10] sm:$0xff]
  %v354 = vld [vmem:[%s350 + $0x18] sm:$0xff]
  %v355 = vpack.c.bf16 %v346, %v346
  %v356 = vld [vmem:[%s1] sm:$0xff]
  %v357 = vld [vmem:[%s1 + $0x8] sm:$0xff]
  %v358 = vld [vmem:[%s1 + $0x10] sm:$0xff]
  %v359 = vld [vmem:[%s1 + $0x18] sm:$0xff]
  %v360 = vld [vmem:[%s1 + $0x20] sm:$0xff]
  %v361 = vld [vmem:[%s1 + $0x28] sm:$0xff]
  %v362 = vld [vmem:[%s1 + $0x30] sm:$0xff]
  %v363 = vld [vmem:[%s1 + $0x38] sm:$0xff]
  %v364 = vld [vmem:[%s1 + $0x40] sm:$0xff]
  %v365 = vld [vmem:[%s1 + $0x48] sm:$0xff]
  %v366 = vld [vmem:[%s1 + $0x50] sm:$0xff]
  %v367 = vld [vmem:[%s1 + $0x58] sm:$0xff]
  %v368 = vld [vmem:[%s1 + $0x60] sm:$0xff]
  %v369 = vld [vmem:[%s1 + $0x68] sm:$0xff]
  %v370 = vld [vmem:[%s1 + $0x70] sm:$0xff]
  %v371 = vld [vmem:[%s1 + $0x78] sm:$0xff]
  %v372 = vld [vmem:[%s1 + $0x80] sm:$0xff]
  %v373 = vld [vmem:[%s1 + $0x88] sm:$0xff]
  %v374 = vld [vmem:[%s1 + $0x90] sm:$0xff]
  %v375 = vld [vmem:[%s1 + $0x98] sm:$0xff]
  %v376 = vld [vmem:[%s1 + $0xa0] sm:$0xff]
  %v377 = vld [vmem:[%s1 + $0xa8] sm:$0xff]
  %v378 = vld [vmem:[%s1 + $0xb0] sm:$0xff]
  %v379 = vld [vmem:[%s1 + $0xb8] sm:$0xff]
  %v380 = vld [vmem:[%s1 + $0xc0] sm:$0xff]
  %v381 = vld [vmem:[%s1 + $0xc8] sm:$0xff]
  %v382 = vld [vmem:[%s1 + $0xd0] sm:$0xff]
  %v383 = vld [vmem:[%s1 + $0xd8] sm:$0xff]
  %v384 = vld [vmem:[%s1 + $0xe0] sm:$0xff]
  %v385 = vld [vmem:[%s1 + $0xe8] sm:$0xff]
  %v386 = vld [vmem:[%s1 + $0xf0] sm:$0xff]
  %v387 = vld [vmem:[%s1 + $0xf8] sm:$0xff]
  %v420 = vunpack.c.l.b16 %v356
  %v421 = vunpack.c.h.b16 %v356
  %v422 = vunpack.c.l.b16 %v357
  %v423 = vunpack.c.h.b16 %v357
  %v424 = vunpack.c.l.b16 %v358
  %v425 = vunpack.c.h.b16 %v358
  %v426 = vunpack.c.l.b16 %v359
  %v427 = vunpack.c.h.b16 %v359
  %v428 = vunpack.c.l.b16 %v360
  %v429 = vunpack.c.h.b16 %v360
  %v430 = vunpack.c.l.b16 %v361
  %v431 = vunpack.c.h.b16 %v361
  %v432 = vunpack.c.l.b16 %v362
  %v433 = vunpack.c.h.b16 %v362
  %v434 = vunpack.c.l.b16 %v363
  %v435 = vunpack.c.h.b16 %v363
  %v436 = vunpack.c.l.b16 %v364
  %v437 = vunpack.c.h.b16 %v364
  %v438 = vunpack.c.l.b16 %v365
  %v439 = vunpack.c.h.b16 %v365
  %v440 = vunpack.c.l.b16 %v366
  %v441 = vunpack.c.h.b16 %v366
  %v442 = vunpack.c.l.b16 %v367
  %v443 = vunpack.c.h.b16 %v367
  %v444 = vunpack.c.l.b16 %v368
  %v445 = vunpack.c.h.b16 %v368
  %v446 = vunpack.c.l.b16 %v369
  %v447 = vunpack.c.h.b16 %v369
  %v448 = vunpack.c.l.b16 %v370
  %v449 = vunpack.c.h.b16 %v370
  %v450 = vunpack.c.l.b16 %v371
  %v451 = vunpack.c.h.b16 %v371
  %v452 = vunpack.c.l.b16 %v372
  %v453 = vunpack.c.h.b16 %v372
  %v454 = vunpack.c.l.b16 %v373
  %v455 = vunpack.c.h.b16 %v373
  %v456 = vunpack.c.l.b16 %v374
  %v457 = vunpack.c.h.b16 %v374
  %v458 = vunpack.c.l.b16 %v375
  %v459 = vunpack.c.h.b16 %v375
  %v460 = vunpack.c.l.b16 %v376
  %v461 = vunpack.c.h.b16 %v376
  %v462 = vunpack.c.l.b16 %v377
  %v463 = vunpack.c.h.b16 %v377
  %v464 = vunpack.c.l.b16 %v378
  %v465 = vunpack.c.h.b16 %v378
  %v466 = vunpack.c.l.b16 %v379
  %v467 = vunpack.c.h.b16 %v379
  %v468 = vunpack.c.l.b16 %v380
  %v469 = vunpack.c.h.b16 %v380
  %v470 = vunpack.c.l.b16 %v381
  %v471 = vunpack.c.h.b16 %v381
  %v472 = vunpack.c.l.b16 %v382
  %v473 = vunpack.c.h.b16 %v382
  %v474 = vunpack.c.l.b16 %v383
  %v475 = vunpack.c.h.b16 %v383
  %v476 = vunpack.c.l.b16 %v384
  %v477 = vunpack.c.h.b16 %v384
  %v478 = vunpack.c.l.b16 %v385
  %v479 = vunpack.c.h.b16 %v385
  %v480 = vunpack.c.l.b16 %v386
  %v481 = vunpack.c.h.b16 %v386
  %v482 = vunpack.c.l.b16 %v387
  %v483 = vunpack.c.h.b16 %v387
  %v484 = vpack.c.b16 %v424, %v420
  %v485 = vpack.c.b16 %v425, %v421
  %v486 = vpack.c.b16 %v426, %v422
  %v487 = vpack.c.b16 %v427, %v423
  %v488 = vpack.c.b16 %v432, %v428
  %v489 = vpack.c.b16 %v433, %v429
  %v490 = vpack.c.b16 %v434, %v430
  %v491 = vpack.c.b16 %v435, %v431
  %v492 = vpack.c.b16 %v440, %v436
  %v493 = vpack.c.b16 %v441, %v437
  %v494 = vpack.c.b16 %v442, %v438
  %v495 = vpack.c.b16 %v443, %v439
  %v496 = vpack.c.b16 %v448, %v444
  %v497 = vpack.c.b16 %v449, %v445
  %v498 = vpack.c.b16 %v450, %v446
  %v499 = vpack.c.b16 %v451, %v447
  %v500 = vpack.c.b16 %v456, %v452
  %v501 = vpack.c.b16 %v457, %v453
  %v502 = vpack.c.b16 %v458, %v454
  %v503 = vpack.c.b16 %v459, %v455
  %v504 = vpack.c.b16 %v464, %v460
  %v505 = vpack.c.b16 %v465, %v461
  %v506 = vpack.c.b16 %v466, %v462
  %v507 = vpack.c.b16 %v467, %v463
  %v508 = vpack.c.b16 %v472, %v468
  %v509 = vpack.c.b16 %v473, %v469
  %v510 = vpack.c.b16 %v474, %v470
  %v511 = vpack.c.b16 %v475, %v471
  %v512 = vpack.c.b16 %v480, %v476
  %v513 = vpack.c.b16 %v481, %v477
  %v514 = vpack.c.b16 %v482, %v478
  %v515 = vpack.c.b16 %v483, %v479
  %548 = vmatpush.bf16.msra.mxu0 %v512
  %549 = vmatpush.bf16.msra.mxu0 %v508
  %550 = vmatpush.bf16.msra.mxu0 %v504
  %551 = vmatpush.bf16.msra.mxu0 %v500
  %552 = vmatpush.bf16.msra.mxu0 %v496
  %553 = vmatpush.bf16.msra.mxu0 %v492
  %554 = vmatpush.bf16.msra.mxu0 %v488
  %555 = vmatpush.bf16.msra.mxu0 %v484
  %556 = vmatmul.bf16.gmra.mxu0 %v355
  %v557 = vpop.f32.mrf.mxu0
  %v558 = vadd.f32 0.0, %v557
  %v559 = vpop.f32.mrf.mxu0
  %560 = vdwg.mxu0
  %561 = vmatpush.bf16.msra.mxu0 %v513
  %562 = vmatpush.bf16.msra.mxu0 %v509
  %563 = vmatpush.bf16.msra.mxu0 %v505
  %564 = vmatpush.bf16.msra.mxu0 %v501
  %565 = vmatpush.bf16.msra.mxu0 %v497
  %566 = vmatpush.bf16.msra.mxu0 %v493
  %567 = vmatpush.bf16.msra.mxu0 %v489
  %568 = vmatpush.bf16.msra.mxu0 %v485
  %569 = vmatmul.bf16.gmra.mxu0 %v355
  %v570 = vpop.f32.mrf.mxu0
  %v571 = vadd.f32 0.0, %v570
  %v572 = vpop.f32.mrf.mxu0
  %573 = vdwg.mxu0
  %574 = vmatpush.bf16.msra.mxu0 %v514
  %575 = vmatpush.bf16.msra.mxu0 %v510
  %576 = vmatpush.bf16.msra.mxu0 %v506
  %577 = vmatpush.bf16.msra.mxu0 %v502
  %578 = vmatpush.bf16.msra.mxu0 %v498
  %579 = vmatpush.bf16.msra.mxu0 %v494
  %580 = vmatpush.bf16.msra.mxu0 %v490
  %581 = vmatpush.bf16.msra.mxu0 %v486
  %582 = vmatmul.bf16.gmra.mxu0 %v355
  %v583 = vpop.f32.mrf.mxu0
  %v584 = vadd.f32 0.0, %v583
  %v585 = vpop.f32.mrf.mxu0
  %586 = vdwg.mxu0
  %587 = vmatpush.bf16.msra.mxu0 %v515
  %588 = vmatpush.bf16.msra.mxu0 %v511
  %589 = vmatpush.bf16.msra.mxu0 %v507
  %590 = vmatpush.bf16.msra.mxu0 %v503
  %591 = vmatpush.bf16.msra.mxu0 %v499
  %592 = vmatpush.bf16.msra.mxu0 %v495
  %593 = vmatpush.bf16.msra.mxu0 %v491
  %594 = vmatpush.bf16.msra.mxu0 %v487
  %595 = vmatmul.bf16.gmra.mxu0 %v355
  %v596 = vpop.f32.mrf.mxu0
  %v597 = vadd.f32 0.0, %v596
  %v598 = vpop.f32.mrf.mxu0
  %599 = vdwg.mxu0
  %v600 = vadd.f32 %v351, %v558
  %v601 = vadd.f32 %v352, %v571
  %v602 = vadd.f32 %v353, %v584
  %v603 = vadd.f32 %v354, %v597
  %v604 = vxor.u32 %v600, 2147483648
  %v605 = vxor.u32 %v601, 2147483648
  %v606 = vxor.u32 %v602, 2147483648
  %v607 = vmul.f32 %v604, 1.442695
  %v608 = vpow.pop %v607
  %v609 = vmul.f32 %v605, 1.442695
  %v610 = vpow.pop %v609
  %v611 = vmul.f32 %v606, 1.442695
  %v612 = vpow.pop %v611
  %v613 = vadd.f32 %v608, 1.0
  %v614 = vadd.f32 %v610, 1.0
  %v615 = vadd.f32 %v612, 1.0
  %v616 = vrcp.pop %v613
  %v617 = vmul.f32 %v613, %v616
  %v618 = vsub.f32 1.0, %v617
  %v619 = vmul.f32 %v616, %v618
  %v620 = vadd.f32 %v616, %v619
  %vm621 = vweird.f32 %v613
  %vm622 = vweird.f32 %v616
  %vm623 = vmor %vm621, %vm622
  %v624 = vsel %vm623, %v616, %v620
  %v625 = vand.u32 2147483647, %v613
  %vm626 = vcmp.eq.f32.partialorder %v625, 8.507059e+37
  %v627 = vand.u32 %v613, 2147483648
  %v628 = vor.u32 1.1754944e-38, %v627
  %v629 = vsel %vm626, %v628, %v624
  %v630 = vmul.f32 1.0, %v629
  %v631 = vrcp.pop %v614
  %v632 = vmul.f32 %v614, %v631
  %v633 = vsub.f32 1.0, %v632
  %v634 = vmul.f32 %v631, %v633
  %v635 = vadd.f32 %v631, %v634
  %vm636 = vweird.f32 %v614
  %vm637 = vweird.f32 %v631
  %vm638 = vmor %vm636, %vm637
  %v639 = vsel %vm638, %v631, %v635
  %v640 = vand.u32 2147483647, %v614
  %vm641 = vcmp.eq.f32.partialorder %v640, 8.507059e+37
  %v642 = vand.u32 %v614, 2147483648
  %v643 = vor.u32 1.1754944e-38, %v642
  %v644 = vsel %vm641, %v643, %v639
  %v645 = vmul.f32 1.0, %v644
  %v646 = vrcp.pop %v615
  %v647 = vmul.f32 %v615, %v646
  %v648 = vsub.f32 1.0, %v647
  %v649 = vmul.f32 %v646, %v648
  %v650 = vadd.f32 %v646, %v649
  %vm651 = vweird.f32 %v615
  %vm652 = vweird.f32 %v646
  %vm653 = vmor %vm651, %vm652
  %v654 = vsel %vm653, %v646, %v650
  %v655 = vand.u32 2147483647, %v615
  %vm656 = vcmp.eq.f32.partialorder %v655, 8.507059e+37
  %v657 = vand.u32 %v615, 2147483648
  %v658 = vor.u32 1.1754944e-38, %v657
  %v659 = vsel %vm656, %v658, %v654
  %v660 = vmul.f32 1.0, %v659
  %v661 = vtanh.pop %v603
  %v662 = vmul.f32 %v645, %v344
  %v663 = vmul.f32 %v630, %v661
  %v664 = vadd.f32 %v662, %v663
  %v665 = vtanh.pop %v664
  %v666 = vmul.f32 %v660, %v665
  %s667 = scalar_lea.vmem [#allocation2], 8
  %668 = vst [vmem:[%s667] sm:$0xff] %v666
  %s669 = smul.u32 2, 4
  %s670 = smul.addr %s669, 8
  %s671 = scalar_lea.vmem %s0, %s670
  %v672 = vld [vmem:[%s671] sm:$0xff]
  %v673 = vld [vmem:[%s671 + $0x8] sm:$0xff]
  %v674 = vld [vmem:[%s671 + $0x10] sm:$0xff]
  %v675 = vld [vmem:[%s671 + $0x18] sm:$0xff]
  %v676 = vpack.c.bf16 %v666, %v666
  %v677 = vld [vmem:[%s1] sm:$0xff]
  %v678 = vld [vmem:[%s1 + $0x8] sm:$0xff]
  %v679 = vld [vmem:[%s1 + $0x10] sm:$0xff]
  %v680 = vld [vmem:[%s1 + $0x18] sm:$0xff]
  %v681 = vld [vmem:[%s1 + $0x20] sm:$0xff]
  %v682 = vld [vmem:[%s1 + $0x28] sm:$0xff]
  %v683 = vld [vmem:[%s1 + $0x30] sm:$0xff]
  %v684 = vld [vmem:[%s1 + $0x38] sm:$0xff]
  %v685 = vld [vmem:[%s1 + $0x40] sm:$0xff]
  %v686 = vld [vmem:[%s1 + $0x48] sm:$0xff]
  %v687 = vld [vmem:[%s1 + $0x50] sm:$0xff]
  %v688 = vld [vmem:[%s1 + $0x58] sm:$0xff]
  %v689 = vld [vmem:[%s1 + $0x60] sm:$0xff]
  %v690 = vld [vmem:[%s1 + $0x68] sm:$0xff]
  %v691 = vld [vmem:[%s1 + $0x70] sm:$0xff]
  %v692 = vld [vmem:[%s1 + $0x78] sm:$0xff]
  %v693 = vld [vmem:[%s1 + $0x80] sm:$0xff]
  %v694 = vld [vmem:[%s1 + $0x88] sm:$0xff]
  %v695 = vld [vmem:[%s1 + $0x90] sm:$0xff]
  %v696 = vld [vmem:[%s1 + $0x98] sm:$0xff]
  %v697 = vld [vmem:[%s1 + $0xa0] sm:$0xff]
  %v698 = vld [vmem:[%s1 + $0xa8] sm:$0xff]
  %v699 = vld [vmem:[%s1 + $0xb0] sm:$0xff]
  %v700 = vld [vmem:[%s1 + $0xb8] sm:$0xff]
  %v701 = vld [vmem:[%s1 + $0xc0] sm:$0xff]
  %v702 = vld [vmem:[%s1 + $0xc8] sm:$0xff]
  %v703 = vld [vmem:[%s1 + $0xd0] sm:$0xff]
  %v704 = vld [vmem:[%s1 + $0xd8] sm:$0xff]
  %v705 = vld [vmem:[%s1 + $0xe0] sm:$0xff]
  %v706 = vld [vmem:[%s1 + $0xe8] sm:$0xff]
  %v707 = vld [vmem:[%s1 + $0xf0] sm:$0xff]
  %v708 = vld [vmem:[%s1 + $0xf8] sm:$0xff]
  %v741 = vunpack.c.l.b16 %v677
  %v742 = vunpack.c.h.b16 %v677
  %v743 = vunpack.c.l.b16 %v678
  %v744 = vunpack.c.h.b16 %v678
  %v745 = vunpack.c.l.b16 %v679
  %v746 = vunpack.c.h.b16 %v679
  %v747 = vunpack.c.l.b16 %v680
  %v748 = vunpack.c.h.b16 %v680
  %v749 = vunpack.c.l.b16 %v681
  %v750 = vunpack.c.h.b16 %v681
  %v751 = vunpack.c.l.b16 %v682
  %v752 = vunpack.c.h.b16 %v682
  %v753 = vunpack.c.l.b16 %v683
  %v754 = vunpack.c.h.b16 %v683
  %v755 = vunpack.c.l.b16 %v684
  %v756 = vunpack.c.h.b16 %v684
  %v757 = vunpack.c.l.b16 %v685
  %v758 = vunpack.c.h.b16 %v685
  %v759 = vunpack.c.l.b16 %v686
  %v760 = vunpack.c.h.b16 %v686
  %v761 = vunpack.c.l.b16 %v687
  %v762 = vunpack.c.h.b16 %v687
  %v763 = vunpack.c.l.b16 %v688
  %v764 = vunpack.c.h.b16 %v688
  %v765 = vunpack.c.l.b16 %v689
  %v766 = vunpack.c.h.b16 %v689
  %v767 = vunpack.c.l.b16 %v690
  %v768 = vunpack.c.h.b16 %v690
  %v769 = vunpack.c.l.b16 %v691
  %v770 = vunpack.c.h.b16 %v691
  %v771 = vunpack.c.l.b16 %v692
  %v772 = vunpack.c.h.b16 %v692
  %v773 = vunpack.c.l.b16 %v693
  %v774 = vunpack.c.h.b16 %v693
  %v775 = vunpack.c.l.b16 %v694
  %v776 = vunpack.c.h.b16 %v694
  %v777 = vunpack.c.l.b16 %v695
  %v778 = vunpack.c.h.b16 %v695
  %v779 = vunpack.c.l.b16 %v696
  %v780 = vunpack.c.h.b16 %v696
  %v781 = vunpack.c.l.b16 %v697
  %v782 = vunpack.c.h.b16 %v697
  %v783 = vunpack.c.l.b16 %v698
  %v784 = vunpack.c.h.b16 %v698
  %v785 = vunpack.c.l.b16 %v699
  %v786 = vunpack.c.h.b16 %v699
  %v787 = vunpack.c.l.b16 %v700
  %v788 = vunpack.c.h.b16 %v700
  %v789 = vunpack.c.l.b16 %v701
  %v790 = vunpack.c.h.b16 %v701
  %v791 = vunpack.c.l.b16 %v702
  %v792 = vunpack.c.h.b16 %v702
  %v793 = vunpack.c.l.b16 %v703
  %v794 = vunpack.c.h.b16 %v703
  %v795 = vunpack.c.l.b16 %v704
  %v796 = vunpack.c.h.b16 %v704
  %v797 = vunpack.c.l.b16 %v705
  %v798 = vunpack.c.h.b16 %v705
  %v799 = vunpack.c.l.b16 %v706
  %v800 = vunpack.c.h.b16 %v706
  %v801 = vunpack.c.l.b16 %v707
  %v802 = vunpack.c.h.b16 %v707
  %v803 = vunpack.c.l.b16 %v708
  %v804 = vunpack.c.h.b16 %v708
  %v805 = vpack.c.b16 %v745, %v741
  %v806 = vpack.c.b16 %v746, %v742
  %v807 = vpack.c.b16 %v747, %v743
  %v808 = vpack.c.b16 %v748, %v744
  %v809 = vpack.c.b16 %v753, %v749
  %v810 = vpack.c.b16 %v754, %v750
  %v811 = vpack.c.b16 %v755, %v751
  %v812 = vpack.c.b16 %v756, %v752
  %v813 = vpack.c.b16 %v761, %v757
  %v814 = vpack.c.b16 %v762, %v758
  %v815 = vpack.c.b16 %v763, %v759
  %v816 = vpack.c.b16 %v764, %v760
  %v817 = vpack.c.b16 %v769, %v765
  %v818 = vpack.c.b16 %v770, %v766
  %v819 = vpack.c.b16 %v771, %v767
  %v820 = vpack.c.b16 %v772, %v768
  %v821 = vpack.c.b16 %v777, %v773
  %v822 = vpack.c.b16 %v778, %v774
  %v823 = vpack.c.b16 %v779, %v775
  %v824 = vpack.c.b16 %v780, %v776
  %v825 = vpack.c.b16 %v785, %v781
  %v826 = vpack.c.b16 %v786, %v782
  %v827 = vpack.c.b16 %v787, %v783
  %v828 = vpack.c.b16 %v788, %v784
  %v829 = vpack.c.b16 %v793, %v789
  %v830 = vpack.c.b16 %v794, %v790
  %v831 = vpack.c.b16 %v795, %v791
  %v832 = vpack.c.b16 %v796, %v792
  %v833 = vpack.c.b16 %v801, %v797
  %v834 = vpack.c.b16 %v802, %v798
  %v835 = vpack.c.b16 %v803, %v799
  %v836 = vpack.c.b16 %v804, %v800
  %869 = vmatpush.bf16.msra.mxu0 %v833
  %870 = vmatpush.bf16.msra.mxu0 %v829
  %871 = vmatpush.bf16.msra.mxu0 %v825
  %872 = vmatpush.bf16.msra.mxu0 %v821
  %873 = vmatpush.bf16.msra.mxu0 %v817
  %874 = vmatpush.bf16.msra.mxu0 %v813
  %875 = vmatpush.bf16.msra.mxu0 %v809
  %876 = vmatpush.bf16.msra.mxu0 %v805
  %877 = vmatmul.bf16.gmra.mxu0 %v676
  %v878 = vpop.f32.mrf.mxu0
  %v879 = vadd.f32 0.0, %v878
  %v880 = vpop.f32.mrf.mxu0
  %881 = vdwg.mxu0
  %882 = vmatpush.bf16.msra.mxu0 %v834
  %883 = vmatpush.bf16.msra.mxu0 %v830
  %884 = vmatpush.bf16.msra.mxu0 %v826
  %885 = vmatpush.bf16.msra.mxu0 %v822
  %886 = vmatpush.bf16.msra.mxu0 %v818
  %887 = vmatpush.bf16.msra.mxu0 %v814
  %888 = vmatpush.bf16.msra.mxu0 %v810
  %889 = vmatpush.bf16.msra.mxu0 %v806
  %890 = vmatmul.bf16.gmra.mxu0 %v676
  %v891 = vpop.f32.mrf.mxu0
  %v892 = vadd.f32 0.0, %v891
  %v893 = vpop.f32.mrf.mxu0
  %894 = vdwg.mxu0
  %895 = vmatpush.bf16.msra.mxu0 %v835
  %896 = vmatpush.bf16.msra.mxu0 %v831
  %897 = vmatpush.bf16.msra.mxu0 %v827
  %898 = vmatpush.bf16.msra.mxu0 %v823
  %899 = vmatpush.bf16.msra.mxu0 %v819
  %900 = vmatpush.bf16.msra.mxu0 %v815
  %901 = vmatpush.bf16.msra.mxu0 %v811
  %902 = vmatpush.bf16.msra.mxu0 %v807
  %903 = vmatmul.bf16.gmra.mxu0 %v676
  %v904 = vpop.f32.mrf.mxu0
  %v905 = vadd.f32 0.0, %v904
  %v906 = vpop.f32.mrf.mxu0
  %907 = vdwg.mxu0
  %908 = vmatpush.bf16.msra.mxu0 %v836
  %909 = vmatpush.bf16.msra.mxu0 %v832
  %910 = vmatpush.bf16.msra.mxu0 %v828
  %911 = vmatpush.bf16.msra.mxu0 %v824
  %912 = vmatpush.bf16.msra.mxu0 %v820
  %913 = vmatpush.bf16.msra.mxu0 %v816
  %914 = vmatpush.bf16.msra.mxu0 %v812
  %915 = vmatpush.bf16.msra.mxu0 %v808
  %916 = vmatmul.bf16.gmra.mxu0 %v676
  %v917 = vpop.f32.mrf.mxu0
  %v918 = vadd.f32 0.0, %v917
  %v919 = vpop.f32.mrf.mxu0
  %920 = vdwg.mxu0
  %v921 = vadd.f32 %v672, %v879
  %v922 = vadd.f32 %v673, %v892
  %v923 = vadd.f32 %v674, %v905
  %v924 = vadd.f32 %v675, %v918
  %v925 = vxor.u32 %v921, 2147483648
  %v926 = vxor.u32 %v922, 2147483648
  %v927 = vxor.u32 %v923, 2147483648
  %v928 = vmul.f32 %v925, 1.442695
  %v929 = vpow.pop %v928
  %v930 = vmul.f32 %v926, 1.442695
  %v931 = vpow.pop %v930
  %v932 = vmul.f32 %v927, 1.442695
  %v933 = vpow.pop %v932
  %v934 = vadd.f32 %v929, 1.0
  %v935 = vadd.f32 %v931, 1.0
  %v936 = vadd.f32 %v933, 1.0
  %v937 = vrcp.pop %v934
  %v938 = vmul.f32 %v934, %v937
  %v939 = vsub.f32 1.0, %v938
  %v940 = vmul.f32 %v937, %v939
  %v941 = vadd.f32 %v937, %v940
  %vm942 = vweird.f32 %v934
  %vm943 = vweird.f32 %v937
  %vm944 = vmor %vm942, %vm943
  %v945 = vsel %vm944, %v937, %v941
  %v946 = vand.u32 2147483647, %v934
  %vm947 = vcmp.eq.f32.partialorder %v946, 8.507059e+37
  %v948 = vand.u32 %v934, 2147483648
  %v949 = vor.u32 1.1754944e-38, %v948
  %v950 = vsel %vm947, %v949, %v945
  %v951 = vmul.f32 1.0, %v950
  %v952 = vrcp.pop %v935
  %v953 = vmul.f32 %v935, %v952
  %v954 = vsub.f32 1.0, %v953
  %v955 = vmul.f32 %v952, %v954
  %v956 = vadd.f32 %v952, %v955
  %vm957 = vweird.f32 %v935
  %vm958 = vweird.f32 %v952
  %vm959 = vmor %vm957, %vm958
  %v960 = vsel %vm959, %v952, %v956
  %v961 = vand.u32 2147483647, %v935
  %vm962 = vcmp.eq.f32.partialorder %v961, 8.507059e+37
  %v963 = vand.u32 %v935, 2147483648
  %v964 = vor.u32 1.1754944e-38, %v963
  %v965 = vsel %vm962, %v964, %v960
  %v966 = vmul.f32 1.0, %v965
  %v967 = vrcp.pop %v936
  %v968 = vmul.f32 %v936, %v967
  %v969 = vsub.f32 1.0, %v968
  %v970 = vmul.f32 %v967, %v969
  %v971 = vadd.f32 %v967, %v970
  %vm972 = vweird.f32 %v936
  %vm973 = vweird.f32 %v967
  %vm974 = vmor %vm972, %vm973
  %v975 = vsel %vm974, %v967, %v971
  %v976 = vand.u32 2147483647, %v936
  %vm977 = vcmp.eq.f32.partialorder %v976, 8.507059e+37
  %v978 = vand.u32 %v936, 2147483648
  %v979 = vor.u32 1.1754944e-38, %v978
  %v980 = vsel %vm977, %v979, %v975
  %v981 = vmul.f32 1.0, %v980
  %v982 = vtanh.pop %v924
  %v983 = vmul.f32 %v966, %v664
  %v984 = vmul.f32 %v951, %v982
  %v985 = vadd.f32 %v983, %v984
  %v986 = vtanh.pop %v985
  %v987 = vmul.f32 %v981, %v986
  %s988 = scalar_lea.vmem [#allocation2], 16
  %989 = vst [vmem:[%s988] sm:$0xff] %v987
  %s990 = smul.u32 3, 4
  %s991 = smul.addr %s990, 8
  %s992 = scalar_lea.vmem %s0, %s991
  %v993 = vld [vmem:[%s992] sm:$0xff]
  %v994 = vld [vmem:[%s992 + $0x8] sm:$0xff]
  %v995 = vld [vmem:[%s992 + $0x10] sm:$0xff]
  %v996 = vld [vmem:[%s992 + $0x18] sm:$0xff]
  %v997 = vpack.c.bf16 %v987, %v987
  %v998 = vld [vmem:[%s1] sm:$0xff]
  %v999 = vld [vmem:[%s1 + $0x8] sm:$0xff]
  %v1000 = vld [vmem:[%s1 + $0x10] sm:$0xff]
  %v1001 = vld [vmem:[%s1 + $0x18] sm:$0xff]
  %v1002 = vld [vmem:[%s1 + $0x20] sm:$0xff]
  %v1003 = vld [vmem:[%s1 + $0x28] sm:$0xff]
  %v1004 = vld [vmem:[%s1 + $0x30] sm:$0xff]
  %v1005 = vld [vmem:[%s1 + $0x38] sm:$0xff]
  %v1006 = vld [vmem:[%s1 + $0x40] sm:$0xff]
  %v1007 = vld [vmem:[%s1 + $0x48] sm:$0xff]
  %v1008 = vld [vmem:[%s1 + $0x50] sm:$0xff]
  %v1009 = vld [vmem:[%s1 + $0x58] sm:$0xff]
  %v1010 = vld [vmem:[%s1 + $0x60] sm:$0xff]
  %v1011 = vld [vmem:[%s1 + $0x68] sm:$0xff]
  %v1012 = vld [vmem:[%s1 + $0x70] sm:$0xff]
  %v1013 = vld [vmem:[%s1 + $0x78] sm:$0xff]
  %v1014 = vld [vmem:[%s1 + $0x80] sm:$0xff]
  %v1015 = vld [vmem:[%s1 + $0x88] sm:$0xff]
  %v1016 = vld [vmem:[%s1 + $0x90] sm:$0xff]
  %v1017 = vld [vmem:[%s1 + $0x98] sm:$0xff]
  %v1018 = vld [vmem:[%s1 + $0xa0] sm:$0xff]
  %v1019 = vld [vmem:[%s1 + $0xa8] sm:$0xff]
  %v1020 = vld [vmem:[%s1 + $0xb0] sm:$0xff]
  %v1021 = vld [vmem:[%s1 + $0xb8] sm:$0xff]
  %v1022 = vld [vmem:[%s1 + $0xc0] sm:$0xff]
  %v1023 = vld [vmem:[%s1 + $0xc8] sm:$0xff]
  %v1024 = vld [vmem:[%s1 + $0xd0] sm:$0xff]
  %v1025 = vld [vmem:[%s1 + $0xd8] sm:$0xff]
  %v1026 = vld [vmem:[%s1 + $0xe0] sm:$0xff]
  %v1027 = vld [vmem:[%s1 + $0xe8] sm:$0xff]
  %v1028 = vld [vmem:[%s1 + $0xf0] sm:$0xff]
  %v1029 = vld [vmem:[%s1 + $0xf8] sm:$0xff]
  %v1062 = vunpack.c.l.b16 %v998
  %v1063 = vunpack.c.h.b16 %v998
  %v1064 = vunpack.c.l.b16 %v999
  %v1065 = vunpack.c.h.b16 %v999
  %v1066 = vunpack.c.l.b16 %v1000
  %v1067 = vunpack.c.h.b16 %v1000
  %v1068 = vunpack.c.l.b16 %v1001
  %v1069 = vunpack.c.h.b16 %v1001
  %v1070 = vunpack.c.l.b16 %v1002
  %v1071 = vunpack.c.h.b16 %v1002
  %v1072 = vunpack.c.l.b16 %v1003
  %v1073 = vunpack.c.h.b16 %v1003
  %v1074 = vunpack.c.l.b16 %v1004
  %v1075 = vunpack.c.h.b16 %v1004
  %v1076 = vunpack.c.l.b16 %v1005
  %v1077 = vunpack.c.h.b16 %v1005
  %v1078 = vunpack.c.l.b16 %v1006
  %v1079 = vunpack.c.h.b16 %v1006
  %v1080 = vunpack.c.l.b16 %v1007
  %v1081 = vunpack.c.h.b16 %v1007
  %v1082 = vunpack.c.l.b16 %v1008
  %v1083 = vunpack.c.h.b16 %v1008
  %v1084 = vunpack.c.l.b16 %v1009
  %v1085 = vunpack.c.h.b16 %v1009
  %v1086 = vunpack.c.l.b16 %v1010
  %v1087 = vunpack.c.h.b16 %v1010
  %v1088 = vunpack.c.l.b16 %v1011
  %v1089 = vunpack.c.h.b16 %v1011
  %v1090 = vunpack.c.l.b16 %v1012
  %v1091 = vunpack.c.h.b16 %v1012
  %v1092 = vunpack.c.l.b16 %v1013
  %v1093 = vunpack.c.h.b16 %v1013
  %v1094 = vunpack.c.l.b16 %v1014
  %v1095 = vunpack.c.h.b16 %v1014
  %v1096 = vunpack.c.l.b16 %v1015
  %v1097 = vunpack.c.h.b16 %v1015
  %v1098 = vunpack.c.l.b16 %v1016
  %v1099 = vunpack.c.h.b16 %v1016
  %v1100 = vunpack.c.l.b16 %v1017
  %v1101 = vunpack.c.h.b16 %v1017
  %v1102 = vunpack.c.l.b16 %v1018
  %v1103 = vunpack.c.h.b16 %v1018
  %v1104 = vunpack.c.l.b16 %v1019
  %v1105 = vunpack.c.h.b16 %v1019
  %v1106 = vunpack.c.l.b16 %v1020
  %v1107 = vunpack.c.h.b16 %v1020
  %v1108 = vunpack.c.l.b16 %v1021
  %v1109 = vunpack.c.h.b16 %v1021
  %v1110 = vunpack.c.l.b16 %v1022
  %v1111 = vunpack.c.h.b16 %v1022
  %v1112 = vunpack.c.l.b16 %v1023
  %v1113 = vunpack.c.h.b16 %v1023
  %v1114 = vunpack.c.l.b16 %v1024
  %v1115 = vunpack.c.h.b16 %v1024
  %v1116 = vunpack.c.l.b16 %v1025
  %v1117 = vunpack.c.h.b16 %v1025
  %v1118 = vunpack.c.l.b16 %v1026
  %v1119 = vunpack.c.h.b16 %v1026
  %v1120 = vunpack.c.l.b16 %v1027
  %v1121 = vunpack.c.h.b16 %v1027
  %v1122 = vunpack.c.l.b16 %v1028
  %v1123 = vunpack.c.h.b16 %v1028
  %v1124 = vunpack.c.l.b16 %v1029
  %v1125 = vunpack.c.h.b16 %v1029
  %v1126 = vpack.c.b16 %v1066, %v1062
  %v1127 = vpack.c.b16 %v1067, %v1063
  %v1128 = vpack.c.b16 %v1068, %v1064
  %v1129 = vpack.c.b16 %v1069, %v1065
  %v1130 = vpack.c.b16 %v1074, %v1070
  %v1131 = vpack.c.b16 %v1075, %v1071
  %v1132 = vpack.c.b16 %v1076, %v1072
  %v1133 = vpack.c.b16 %v1077, %v1073
  %v1134 = vpack.c.b16 %v1082, %v1078
  %v1135 = vpack.c.b16 %v1083, %v1079
  %v1136 = vpack.c.b16 %v1084, %v1080
  %v1137 = vpack.c.b16 %v1085, %v1081
  %v1138 = vpack.c.b16 %v1090, %v1086
  %v1139 = vpack.c.b16 %v1091, %v1087
  %v1140 = vpack.c.b16 %v1092, %v1088
  %v1141 = vpack.c.b16 %v1093, %v1089
  %v1142 = vpack.c.b16 %v1098, %v1094
  %v1143 = vpack.c.b16 %v1099, %v1095
  %v1144 = vpack.c.b16 %v1100, %v1096
  %v1145 = vpack.c.b16 %v1101, %v1097
  %v1146 = vpack.c.b16 %v1106, %v1102
  %v1147 = vpack.c.b16 %v1107, %v1103
  %v1148 = vpack.c.b16 %v1108, %v1104
  %v1149 = vpack.c.b16 %v1109, %v1105
  %v1150 = vpack.c.b16 %v1114, %v1110
  %v1151 = vpack.c.b16 %v1115, %v1111
  %v1152 = vpack.c.b16 %v1116, %v1112
  %v1153 = vpack.c.b16 %v1117, %v1113
  %v1154 = vpack.c.b16 %v1122, %v1118
  %v1155 = vpack.c.b16 %v1123, %v1119
  %v1156 = vpack.c.b16 %v1124, %v1120
  %v1157 = vpack.c.b16 %v1125, %v1121
  %1190 = vmatpush.bf16.msra.mxu0 %v1154
  %1191 = vmatpush.bf16.msra.mxu0 %v1150
  %1192 = vmatpush.bf16.msra.mxu0 %v1146
  %1193 = vmatpush.bf16.msra.mxu0 %v1142
  %1194 = vmatpush.bf16.msra.mxu0 %v1138
  %1195 = vmatpush.bf16.msra.mxu0 %v1134
  %1196 = vmatpush.bf16.msra.mxu0 %v1130
  %1197 = vmatpush.bf16.msra.mxu0 %v1126
  %1198 = vmatmul.bf16.gmra.mxu0 %v997
  %v1199 = vpop.f32.mrf.mxu0
  %v1200 = vadd.f32 0.0, %v1199
  %v1201 = vpop.f32.mrf.mxu0
  %1202 = vdwg.mxu0
  %1203 = vmatpush.bf16.msra.mxu0 %v1155
  %1204 = vmatpush.bf16.msra.mxu0 %v1151
  %1205 = vmatpush.bf16.msra.mxu0 %v1147
  %1206 = vmatpush.bf16.msra.mxu0 %v1143
  %1207 = vmatpush.bf16.msra.mxu0 %v1139
  %1208 = vmatpush.bf16.msra.mxu0 %v1135
  %1209 = vmatpush.bf16.msra.mxu0 %v1131
  %1210 = vmatpush.bf16.msra.mxu0 %v1127
  %1211 = vmatmul.bf16.gmra.mxu0 %v997
  %v1212 = vpop.f32.mrf.mxu0
  %v1213 = vadd.f32 0.0, %v1212
  %v1214 = vpop.f32.mrf.mxu0
  %1215 = vdwg.mxu0
  %1216 = vmatpush.bf16.msra.mxu0 %v1156
  %1217 = vmatpush.bf16.msra.mxu0 %v1152
  %1218 = vmatpush.bf16.msra.mxu0 %v1148
  %1219 = vmatpush.bf16.msra.mxu0 %v1144
  %1220 = vmatpush.bf16.msra.mxu0 %v1140
  %1221 = vmatpush.bf16.msra.mxu0 %v1136
  %1222 = vmatpush.bf16.msra.mxu0 %v1132
  %1223 = vmatpush.bf16.msra.mxu0 %v1128
  %1224 = vmatmul.bf16.gmra.mxu0 %v997
  %v1225 = vpop.f32.mrf.mxu0
  %v1226 = vadd.f32 0.0, %v1225
  %v1227 = vpop.f32.mrf.mxu0
  %1228 = vdwg.mxu0
  %1229 = vmatpush.bf16.msra.mxu0 %v1157
  %1230 = vmatpush.bf16.msra.mxu0 %v1153
  %1231 = vmatpush.bf16.msra.mxu0 %v1149
  %1232 = vmatpush.bf16.msra.mxu0 %v1145
  %1233 = vmatpush.bf16.msra.mxu0 %v1141
  %1234 = vmatpush.bf16.msra.mxu0 %v1137
  %1235 = vmatpush.bf16.msra.mxu0 %v1133
  %1236 = vmatpush.bf16.msra.mxu0 %v1129
  %1237 = vmatmul.bf16.gmra.mxu0 %v997
  %v1238 = vpop.f32.mrf.mxu0
  %v1239 = vadd.f32 0.0, %v1238
  %v1240 = vpop.f32.mrf.mxu0
  %1241 = vdwg.mxu0
  %v1242 = vadd.f32 %v993, %v1200
  %v1243 = vadd.f32 %v994, %v1213
  %v1244 = vadd.f32 %v995, %v1226
  %v1245 = vadd.f32 %v996, %v1239
  %v1246 = vxor.u32 %v1242, 2147483648
  %v1247 = vxor.u32 %v1243, 2147483648
  %v1248 = vxor.u32 %v1244, 2147483648
  %v1249 = vmul.f32 %v1246, 1.442695
  %v1250 = vpow.pop %v1249
  %v1251 = vmul.f32 %v1247, 1.442695
  %v1252 = vpow.pop %v1251
  %v1253 = vmul.f32 %v1248, 1.442695
  %v1254 = vpow.pop %v1253
  %v1255 = vadd.f32 %v1250, 1.0
  %v1256 = vadd.f32 %v1252, 1.0
  %v1257 = vadd.f32 %v1254, 1.0
  %v1258 = vrcp.pop %v1255
  %v1259 = vmul.f32 %v1255, %v1258
  %v1260 = vsub.f32 1.0, %v1259
  %v1261 = vmul.f32 %v1258, %v1260
  %v1262 = vadd.f32 %v1258, %v1261
  %vm1263 = vweird.f32 %v1255
  %vm1264 = vweird.f32 %v1258
  %vm1265 = vmor %vm1263, %vm1264
  %v1266 = vsel %vm1265, %v1258, %v1262
  %v1267 = vand.u32 2147483647, %v1255
  %vm1268 = vcmp.eq.f32.partialorder %v1267, 8.507059e+37
  %v1269 = vand.u32 %v1255, 2147483648
  %v1270 = vor.u32 1.1754944e-38, %v1269
  %v1271 = vsel %vm1268, %v1270, %v1266
  %v1272 = vmul.f32 1.0, %v1271
  %v1273 = vrcp.pop %v1256
  %v1274 = vmul.f32 %v1256, %v1273
  %v1275 = vsub.f32 1.0, %v1274
  %v1276 = vmul.f32 %v1273, %v1275
  %v1277 = vadd.f32 %v1273, %v1276
  %vm1278 = vweird.f32 %v1256
  %vm1279 = vweird.f32 %v1273
  %vm1280 = vmor %vm1278, %vm1279
  %v1281 = vsel %vm1280, %v1273, %v1277
  %v1282 = vand.u32 2147483647, %v1256
  %vm1283 = vcmp.eq.f32.partialorder %v1282, 8.507059e+37
  %v1284 = vand.u32 %v1256, 2147483648
  %v1285 = vor.u32 1.1754944e-38, %v1284
  %v1286 = vsel %vm1283, %v1285, %v1281
  %v1287 = vmul.f32 1.0, %v1286
  %v1288 = vrcp.pop %v1257
  %v1289 = vmul.f32 %v1257, %v1288
  %v1290 = vsub.f32 1.0, %v1289
  %v1291 = vmul.f32 %v1288, %v1290
  %v1292 = vadd.f32 %v1288, %v1291
  %vm1293 = vweird.f32 %v1257
  %vm1294 = vweird.f32 %v1288
  %vm1295 = vmor %vm1293, %vm1294
  %v1296 = vsel %vm1295, %v1288, %v1292
  %v1297 = vand.u32 2147483647, %v1257
  %vm1298 = vcmp.eq.f32.partialorder %v1297, 8.507059e+37
  %v1299 = vand.u32 %v1257, 2147483648
  %v1300 = vor.u32 1.1754944e-38, %v1299
  %v1301 = vsel %vm1298, %v1300, %v1296
  %v1302 = vmul.f32 1.0, %v1301
  %v1303 = vtanh.pop %v1245
  %v1304 = vmul.f32 %v1287, %v985
  %v1305 = vmul.f32 %v1272, %v1303
  %v1306 = vadd.f32 %v1304, %v1305
  %v1307 = vtanh.pop %v1306
  %v1308 = vmul.f32 %v1302, %v1307
  %s1309 = scalar_lea.vmem [#allocation2], 24
  %1310 = vst [vmem:[%s1309] sm:$0xff] %v1308
  %s1311 = smul.u32 4, 4
  %s1312 = smul.addr %s1311, 8
  %s1313 = scalar_lea.vmem %s0, %s1312
  %v1314 = vld [vmem:[%s1313] sm:$0xff]
  %v1315 = vld [vmem:[%s1313 + $0x8] sm:$0xff]
  %v1316 = vld [vmem:[%s1313 + $0x10] sm:$0xff]
  %v1317 = vld [vmem:[%s1313 + $0x18] sm:$0xff]
  %v1318 = vpack.c.bf16 %v1308, %v1308
  %v1319 = vld [vmem:[%s1] sm:$0xff]
  %v1320 = vld [vmem:[%s1 + $0x8] sm:$0xff]
  %v1321 = vld [vmem:[%s1 + $0x10] sm:$0xff]
  %v1322 = vld [vmem:[%s1 + $0x18] sm:$0xff]
  %v1323 = vld [vmem:[%s1 + $0x20] sm:$0xff]
  %v1324 = vld [vmem:[%s1 + $0x28] sm:$0xff]
  %v1325 = vld [vmem:[%s1 + $0x30] sm:$0xff]
  %v1326 = vld [vmem:[%s1 + $0x38] sm:$0xff]
  %v1327 = vld [vmem:[%s1 + $0x40] sm:$0xff]
  %v1328 = vld [vmem:[%s1 + $0x48] sm:$0xff]
  %v1329 = vld [vmem:[%s1 + $0x50] sm:$0xff]
  %v1330 = vld [vmem:[%s1 + $0x58] sm:$0xff]
  %v1331 = vld [vmem:[%s1 + $0x60] sm:$0xff]
  %v1332 = vld [vmem:[%s1 + $0x68] sm:$0xff]
  %v1333 = vld [vmem:[%s1 + $0x70] sm:$0xff]
  %v1334 = vld [vmem:[%s1 + $0x78] sm:$0xff]
  %v1335 = vld [vmem:[%s1 + $0x80] sm:$0xff]
  %v1336 = vld [vmem:[%s1 + $0x88] sm:$0xff]
  %v1337 = vld [vmem:[%s1 + $0x90] sm:$0xff]
  %v1338 = vld [vmem:[%s1 + $0x98] sm:$0xff]
  %v1339 = vld [vmem:[%s1 + $0xa0] sm:$0xff]
  %v1340 = vld [vmem:[%s1 + $0xa8] sm:$0xff]
  %v1341 = vld [vmem:[%s1 + $0xb0] sm:$0xff]
  %v1342 = vld [vmem:[%s1 + $0xb8] sm:$0xff]
  %v1343 = vld [vmem:[%s1 + $0xc0] sm:$0xff]
  %v1344 = vld [vmem:[%s1 + $0xc8] sm:$0xff]
  %v1345 = vld [vmem:[%s1 + $0xd0] sm:$0xff]
  %v1346 = vld [vmem:[%s1 + $0xd8] sm:$0xff]
  %v1347 = vld [vmem:[%s1 + $0xe0] sm:$0xff]
  %v1348 = vld [vmem:[%s1 + $0xe8] sm:$0xff]
  %v1349 = vld [vmem:[%s1 + $0xf0] sm:$0xff]
  %v1350 = vld [vmem:[%s1 + $0xf8] sm:$0xff]
  %v1383 = vunpack.c.l.b16 %v1319
  %v1384 = vunpack.c.h.b16 %v1319
  %v1385 = vunpack.c.l.b16 %v1320
  %v1386 = vunpack.c.h.b16 %v1320
  %v1387 = vunpack.c.l.b16 %v1321
  %v1388 = vunpack.c.h.b16 %v1321
  %v1389 = vunpack.c.l.b16 %v1322
  %v1390 = vunpack.c.h.b16 %v1322
  %v1391 = vunpack.c.l.b16 %v1323
  %v1392 = vunpack.c.h.b16 %v1323
  %v1393 = vunpack.c.l.b16 %v1324
  %v1394 = vunpack.c.h.b16 %v1324
  %v1395 = vunpack.c.l.b16 %v1325
  %v1396 = vunpack.c.h.b16 %v1325
  %v1397 = vunpack.c.l.b16 %v1326
  %v1398 = vunpack.c.h.b16 %v1326
  %v1399 = vunpack.c.l.b16 %v1327
  %v1400 = vunpack.c.h.b16 %v1327
  %v1401 = vunpack.c.l.b16 %v1328
  %v1402 = vunpack.c.h.b16 %v1328
  %v1403 = vunpack.c.l.b16 %v1329
  %v1404 = vunpack.c.h.b16 %v1329
  %v1405 = vunpack.c.l.b16 %v1330
  %v1406 = vunpack.c.h.b16 %v1330
  %v1407 = vunpack.c.l.b16 %v1331
  %v1408 = vunpack.c.h.b16 %v1331
  %v1409 = vunpack.c.l.b16 %v1332
  %v1410 = vunpack.c.h.b16 %v1332
  %v1411 = vunpack.c.l.b16 %v1333
  %v1412 = vunpack.c.h.b16 %v1333
  %v1413 = vunpack.c.l.b16 %v1334
  %v1414 = vunpack.c.h.b16 %v1334
  %v1415 = vunpack.c.l.b16 %v1335
  %v1416 = vunpack.c.h.b16 %v1335
  %v1417 = vunpack.c.l.b16 %v1336
  %v1418 = vunpack.c.h.b16 %v1336
  %v1419 = vunpack.c.l.b16 %v1337
  %v1420 = vunpack.c.h.b16 %v1337
  %v1421 = vunpack.c.l.b16 %v1338
  %v1422 = vunpack.c.h.b16 %v1338
  %v1423 = vunpack.c.l.b16 %v1339
  %v1424 = vunpack.c.h.b16 %v1339
  %v1425 = vunpack.c.l.b16 %v1340
  %v1426 = vunpack.c.h.b16 %v1340
  %v1427 = vunpack.c.l.b16 %v1341
  %v1428 = vunpack.c.h.b16 %v1341
  %v1429 = vunpack.c.l.b16 %v1342
  %v1430 = vunpack.c.h.b16 %v1342
  %v1431 = vunpack.c.l.b16 %v1343
  %v1432 = vunpack.c.h.b16 %v1343
  %v1433 = vunpack.c.l.b16 %v1344
  %v1434 = vunpack.c.h.b16 %v1344
  %v1435 = vunpack.c.l.b16 %v1345
  %v1436 = vunpack.c.h.b16 %v1345
  %v1437 = vunpack.c.l.b16 %v1346
  %v1438 = vunpack.c.h.b16 %v1346
  %v1439 = vunpack.c.l.b16 %v1347
  %v1440 = vunpack.c.h.b16 %v1347
  %v1441 = vunpack.c.l.b16 %v1348
  %v1442 = vunpack.c.h.b16 %v1348
  %v1443 = vunpack.c.l.b16 %v1349
  %v1444 = vunpack.c.h.b16 %v1349
  %v1445 = vunpack.c.l.b16 %v1350
  %v1446 = vunpack.c.h.b16 %v1350
  %v1447 = vpack.c.b16 %v1387, %v1383
  %v1448 = vpack.c.b16 %v1388, %v1384
  %v1449 = vpack.c.b16 %v1389, %v1385
  %v1450 = vpack.c.b16 %v1390, %v1386
  %v1451 = vpack.c.b16 %v1395, %v1391
  %v1452 = vpack.c.b16 %v1396, %v1392
  %v1453 = vpack.c.b16 %v1397, %v1393
  %v1454 = vpack.c.b16 %v1398, %v1394
  %v1455 = vpack.c.b16 %v1403, %v1399
  %v1456 = vpack.c.b16 %v1404, %v1400
  %v1457 = vpack.c.b16 %v1405, %v1401
  %v1458 = vpack.c.b16 %v1406, %v1402
  %v1459 = vpack.c.b16 %v1411, %v1407
  %v1460 = vpack.c.b16 %v1412, %v1408
  %v1461 = vpack.c.b16 %v1413, %v1409
  %v1462 = vpack.c.b16 %v1414, %v1410
  %v1463 = vpack.c.b16 %v1419, %v1415
  %v1464 = vpack.c.b16 %v1420, %v1416
  %v1465 = vpack.c.b16 %v1421, %v1417
  %v1466 = vpack.c.b16 %v1422, %v1418
  %v1467 = vpack.c.b16 %v1427, %v1423
  %v1468 = vpack.c.b16 %v1428, %v1424
  %v1469 = vpack.c.b16 %v1429, %v1425
  %v1470 = vpack.c.b16 %v1430, %v1426
  %v1471 = vpack.c.b16 %v1435, %v1431
  %v1472 = vpack.c.b16 %v1436, %v1432
  %v1473 = vpack.c.b16 %v1437, %v1433
  %v1474 = vpack.c.b16 %v1438, %v1434
  %v1475 = vpack.c.b16 %v1443, %v1439
  %v1476 = vpack.c.b16 %v1444, %v1440
  %v1477 = vpack.c.b16 %v1445, %v1441
  %v1478 = vpack.c.b16 %v1446, %v1442
  %1511 = vmatpush.bf16.msra.mxu0 %v1475
  %1512 = vmatpush.bf16.msra.mxu0 %v1471
  %1513 = vmatpush.bf16.msra.mxu0 %v1467
  %1514 = vmatpush.bf16.msra.mxu0 %v1463
  %1515 = vmatpush.bf16.msra.mxu0 %v1459
  %1516 = vmatpush.bf16.msra.mxu0 %v1455
  %1517 = vmatpush.bf16.msra.mxu0 %v1451
  %1518 = vmatpush.bf16.msra.mxu0 %v1447
  %1519 = vmatmul.bf16.gmra.mxu0 %v1318
  %v1520 = vpop.f32.mrf.mxu0
  %v1521 = vadd.f32 0.0, %v1520
  %v1522 = vpop.f32.mrf.mxu0
  %1523 = vdwg.mxu0
  %1524 = vmatpush.bf16.msra.mxu0 %v1476
  %1525 = vmatpush.bf16.msra.mxu0 %v1472
  %1526 = vmatpush.bf16.msra.mxu0 %v1468
  %1527 = vmatpush.bf16.msra.mxu0 %v1464
  %1528 = vmatpush.bf16.msra.mxu0 %v1460
  %1529 = vmatpush.bf16.msra.mxu0 %v1456
  %1530 = vmatpush.bf16.msra.mxu0 %v1452
  %1531 = vmatpush.bf16.msra.mxu0 %v1448
  %1532 = vmatmul.bf16.gmra.mxu0 %v1318
  %v1533 = vpop.f32.mrf.mxu0
  %v1534 = vadd.f32 0.0, %v1533
  %v1535 = vpop.f32.mrf.mxu0
  %1536 = vdwg.mxu0
  %1537 = vmatpush.bf16.msra.mxu0 %v1477
  %1538 = vmatpush.bf16.msra.mxu0 %v1473
  %1539 = vmatpush.bf16.msra.mxu0 %v1469
  %1540 = vmatpush.bf16.msra.mxu0 %v1465
  %1541 = vmatpush.bf16.msra.mxu0 %v1461
  %1542 = vmatpush.bf16.msra.mxu0 %v1457
  %1543 = vmatpush.bf16.msra.mxu0 %v1453
  %1544 = vmatpush.bf16.msra.mxu0 %v1449
  %1545 = vmatmul.bf16.gmra.mxu0 %v1318
  %v1546 = vpop.f32.mrf.mxu0
  %v1547 = vadd.f32 0.0, %v1546
  %v1548 = vpop.f32.mrf.mxu0
  %1549 = vdwg.mxu0
  %1550 = vmatpush.bf16.msra.mxu0 %v1478
  %1551 = vmatpush.bf16.msra.mxu0 %v1474
  %1552 = vmatpush.bf16.msra.mxu0 %v1470
  %1553 = vmatpush.bf16.msra.mxu0 %v1466
  %1554 = vmatpush.bf16.msra.mxu0 %v1462
  %1555 = vmatpush.bf16.msra.mxu0 %v1458
  %1556 = vmatpush.bf16.msra.mxu0 %v1454
  %1557 = vmatpush.bf16.msra.mxu0 %v1450
  %1558 = vmatmul.bf16.gmra.mxu0 %v1318
  %v1559 = vpop.f32.mrf.mxu0
  %v1560 = vadd.f32 0.0, %v1559
  %v1561 = vpop.f32.mrf.mxu0
  %1562 = vdwg.mxu0
  %v1563 = vadd.f32 %v1314, %v1521
  %v1564 = vadd.f32 %v1315, %v1534
  %v1565 = vadd.f32 %v1316, %v1547
  %v1566 = vadd.f32 %v1317, %v1560
  %v1567 = vxor.u32 %v1563, 2147483648
  %v1568 = vxor.u32 %v1564, 2147483648
  %v1569 = vxor.u32 %v1565, 2147483648
  %v1570 = vmul.f32 %v1567, 1.442695
  %v1571 = vpow.pop %v1570
  %v1572 = vmul.f32 %v1568, 1.442695
  %v1573 = vpow.pop %v1572
  %v1574 = vmul.f32 %v1569, 1.442695
  %v1575 = vpow.pop %v1574
  %v1576 = vadd.f32 %v1571, 1.0
  %v1577 = vadd.f32 %v1573, 1.0
  %v1578 = vadd.f32 %v1575, 1.0
  %v1579 = vrcp.pop %v1576
  %v1580 = vmul.f32 %v1576, %v1579
  %v1581 = vsub.f32 1.0, %v1580
  %v1582 = vmul.f32 %v1579, %v1581
  %v1583 = vadd.f32 %v1579, %v1582
  %vm1584 = vweird.f32 %v1576
  %vm1585 = vweird.f32 %v1579
  %vm1586 = vmor %vm1584, %vm1585
  %v1587 = vsel %vm1586, %v1579, %v1583
  %v1588 = vand.u32 2147483647, %v1576
  %vm1589 = vcmp.eq.f32.partialorder %v1588, 8.507059e+37
  %v1590 = vand.u32 %v1576, 2147483648
  %v1591 = vor.u32 1.1754944e-38, %v1590
  %v1592 = vsel %vm1589, %v1591, %v1587
  %v1593 = vmul.f32 1.0, %v1592
  %v1594 = vrcp.pop %v1577
  %v1595 = vmul.f32 %v1577, %v1594
  %v1596 = vsub.f32 1.0, %v1595
  %v1597 = vmul.f32 %v1594, %v1596
  %v1598 = vadd.f32 %v1594, %v1597
  %vm1599 = vweird.f32 %v1577
  %vm1600 = vweird.f32 %v1594
  %vm1601 = vmor %vm1599, %vm1600
  %v1602 = vsel %vm1601, %v1594, %v1598
  %v1603 = vand.u32 2147483647, %v1577
  %vm1604 = vcmp.eq.f32.partialorder %v1603, 8.507059e+37
  %v1605 = vand.u32 %v1577, 2147483648
  %v1606 = vor.u32 1.1754944e-38, %v1605
  %v1607 = vsel %vm1604, %v1606, %v1602
  %v1608 = vmul.f32 1.0, %v1607
  %v1609 = vrcp.pop %v1578
  %v1610 = vmul.f32 %v1578, %v1609
  %v1611 = vsub.f32 1.0, %v1610
  %v1612 = vmul.f32 %v1609, %v1611
  %v1613 = vadd.f32 %v1609, %v1612
  %vm1614 = vweird.f32 %v1578
  %vm1615 = vweird.f32 %v1609
  %vm1616 = vmor %vm1614, %vm1615
  %v1617 = vsel %vm1616, %v1609, %v1613
  %v1618 = vand.u32 2147483647, %v1578
  %vm1619 = vcmp.eq.f32.partialorder %v1618, 8.507059e+37
  %v1620 = vand.u32 %v1578, 2147483648
  %v1621 = vor.u32 1.1754944e-38, %v1620
  %v1622 = vsel %vm1619, %v1621, %v1617
  %v1623 = vmul.f32 1.0, %v1622
  %v1624 = vtanh.pop %v1566
  %v1625 = vmul.f32 %v1608, %v1306
  %v1626 = vmul.f32 %v1593, %v1624
  %v1627 = vadd.f32 %v1625, %v1626
  %v1628 = vtanh.pop %v1627
  %v1629 = vmul.f32 %v1623, %v1628
  %s1630 = scalar_lea.vmem [#allocation2], 32
  %1631 = vst [vmem:[%s1630] sm:$0xff] %v1629
  %s1632 = smul.u32 5, 4
  %s1633 = smul.addr %s1632, 8
  %s1634 = scalar_lea.vmem %s0, %s1633
  %v1635 = vld [vmem:[%s1634] sm:$0xff]
  %v1636 = vld [vmem:[%s1634 + $0x8] sm:$0xff]
  %v1637 = vld [vmem:[%s1634 + $0x10] sm:$0xff]
  %v1638 = vld [vmem:[%s1634 + $0x18] sm:$0xff]
  %v1639 = vpack.c.bf16 %v1629, %v1629
  %v1640 = vld [vmem:[%s1] sm:$0xff]
  %v1641 = vld [vmem:[%s1 + $0x8] sm:$0xff]
  %v1642 = vld [vmem:[%s1 + $0x10] sm:$0xff]
  %v1643 = vld [vmem:[%s1 + $0x18] sm:$0xff]
  %v1644 = vld [vmem:[%s1 + $0x20] sm:$0xff]
  %v1645 = vld [vmem:[%s1 + $0x28] sm:$0xff]
  %v1646 = vld [vmem:[%s1 + $0x30] sm:$0xff]
  %v1647 = vld [vmem:[%s1 + $0x38] sm:$0xff]
  %v1648 = vld [vmem:[%s1 + $0x40] sm:$0xff]
  %v1649 = vld [vmem:[%s1 + $0x48] sm:$0xff]
  %v1650 = vld [vmem:[%s1 + $0x50] sm:$0xff]
  %v1651 = vld [vmem:[%s1 + $0x58] sm:$0xff]
  %v1652 = vld [vmem:[%s1 + $0x60] sm:$0xff]
  %v1653 = vld [vmem:[%s1 + $0x68] sm:$0xff]
  %v1654 = vld [vmem:[%s1 + $0x70] sm:$0xff]
  %v1655 = vld [vmem:[%s1 + $0x78] sm:$0xff]
  %v1656 = vld [vmem:[%s1 + $0x80] sm:$0xff]
  %v1657 = vld [vmem:[%s1 + $0x88] sm:$0xff]
  %v1658 = vld [vmem:[%s1 + $0x90] sm:$0xff]
  %v1659 = vld [vmem:[%s1 + $0x98] sm:$0xff]
  %v1660 = vld [vmem:[%s1 + $0xa0] sm:$0xff]
  %v1661 = vld [vmem:[%s1 + $0xa8] sm:$0xff]
  %v1662 = vld [vmem:[%s1 + $0xb0] sm:$0xff]
  %v1663 = vld [vmem:[%s1 + $0xb8] sm:$0xff]
  %v1664 = vld [vmem:[%s1 + $0xc0] sm:$0xff]
  %v1665 = vld [vmem:[%s1 + $0xc8] sm:$0xff]
  %v1666 = vld [vmem:[%s1 + $0xd0] sm:$0xff]
  %v1667 = vld [vmem:[%s1 + $0xd8] sm:$0xff]
  %v1668 = vld [vmem:[%s1 + $0xe0] sm:$0xff]
  %v1669 = vld [vmem:[%s1 + $0xe8] sm:$0xff]
  %v1670 = vld [vmem:[%s1 + $0xf0] sm:$0xff]
  %v1671 = vld [vmem:[%s1 + $0xf8] sm:$0xff]
  %v1704 = vunpack.c.l.b16 %v1640
  %v1705 = vunpack.c.h.b16 %v1640
  %v1706 = vunpack.c.l.b16 %v1641
  %v1707 = vunpack.c.h.b16 %v1641
  %v1708 = vunpack.c.l.b16 %v1642
  %v1709 = vunpack.c.h.b16 %v1642
  %v1710 = vunpack.c.l.b16 %v1643
  %v1711 = vunpack.c.h.b16 %v1643
  %v1712 = vunpack.c.l.b16 %v1644
  %v1713 = vunpack.c.h.b16 %v1644
  %v1714 = vunpack.c.l.b16 %v1645
  %v1715 = vunpack.c.h.b16 %v1645
  %v1716 = vunpack.c.l.b16 %v1646
  %v1717 = vunpack.c.h.b16 %v1646
  %v1718 = vunpack.c.l.b16 %v1647
  %v1719 = vunpack.c.h.b16 %v1647
  %v1720 = vunpack.c.l.b16 %v1648
  %v1721 = vunpack.c.h.b16 %v1648
  %v1722 = vunpack.c.l.b16 %v1649
  %v1723 = vunpack.c.h.b16 %v1649
  %v1724 = vunpack.c.l.b16 %v1650
  %v1725 = vunpack.c.h.b16 %v1650
  %v1726 = vunpack.c.l.b16 %v1651
  %v1727 = vunpack.c.h.b16 %v1651
  %v1728 = vunpack.c.l.b16 %v1652
  %v1729 = vunpack.c.h.b16 %v1652
  %v1730 = vunpack.c.l.b16 %v1653
  %v1731 = vunpack.c.h.b16 %v1653
  %v1732 = vunpack.c.l.b16 %v1654
  %v1733 = vunpack.c.h.b16 %v1654
  %v1734 = vunpack.c.l.b16 %v1655
  %v1735 = vunpack.c.h.b16 %v1655
  %v1736 = vunpack.c.l.b16 %v1656
  %v1737 = vunpack.c.h.b16 %v1656
  %v1738 = vunpack.c.l.b16 %v1657
  %v1739 = vunpack.c.h.b16 %v1657
  %v1740 = vunpack.c.l.b16 %v1658
  %v1741 = vunpack.c.h.b16 %v1658
  %v1742 = vunpack.c.l.b16 %v1659
  %v1743 = vunpack.c.h.b16 %v1659
  %v1744 = vunpack.c.l.b16 %v1660
  %v1745 = vunpack.c.h.b16 %v1660
  %v1746 = vunpack.c.l.b16 %v1661
  %v1747 = vunpack.c.h.b16 %v1661
  %v1748 = vunpack.c.l.b16 %v1662
  %v1749 = vunpack.c.h.b16 %v1662
  %v1750 = vunpack.c.l.b16 %v1663
  %v1751 = vunpack.c.h.b16 %v1663
  %v1752 = vunpack.c.l.b16 %v1664
  %v1753 = vunpack.c.h.b16 %v1664
  %v1754 = vunpack.c.l.b16 %v1665
  %v1755 = vunpack.c.h.b16 %v1665
  %v1756 = vunpack.c.l.b16 %v1666
  %v1757 = vunpack.c.h.b16 %v1666
  %v1758 = vunpack.c.l.b16 %v1667
  %v1759 = vunpack.c.h.b16 %v1667
  %v1760 = vunpack.c.l.b16 %v1668
  %v1761 = vunpack.c.h.b16 %v1668
  %v1762 = vunpack.c.l.b16 %v1669
  %v1763 = vunpack.c.h.b16 %v1669
  %v1764 = vunpack.c.l.b16 %v1670
  %v1765 = vunpack.c.h.b16 %v1670
  %v1766 = vunpack.c.l.b16 %v1671
  %v1767 = vunpack.c.h.b16 %v1671
  %v1768 = vpack.c.b16 %v1708, %v1704
  %v1769 = vpack.c.b16 %v1709, %v1705
  %v1770 = vpack.c.b16 %v1710, %v1706
  %v1771 = vpack.c.b16 %v1711, %v1707
  %v1772 = vpack.c.b16 %v1716, %v1712
  %v1773 = vpack.c.b16 %v1717, %v1713
  %v1774 = vpack.c.b16 %v1718, %v1714
  %v1775 = vpack.c.b16 %v1719, %v1715
  %v1776 = vpack.c.b16 %v1724, %v1720
  %v1777 = vpack.c.b16 %v1725, %v1721
  %v1778 = vpack.c.b16 %v1726, %v1722
  %v1779 = vpack.c.b16 %v1727, %v1723
  %v1780 = vpack.c.b16 %v1732, %v1728
  %v1781 = vpack.c.b16 %v1733, %v1729
  %v1782 = vpack.c.b16 %v1734, %v1730
  %v1783 = vpack.c.b16 %v1735, %v1731
  %v1784 = vpack.c.b16 %v1740, %v1736
  %v1785 = vpack.c.b16 %v1741, %v1737
  %v1786 = vpack.c.b16 %v1742, %v1738
  %v1787 = vpack.c.b16 %v1743, %v1739
  %v1788 = vpack.c.b16 %v1748, %v1744
  %v1789 = vpack.c.b16 %v1749, %v1745
  %v1790 = vpack.c.b16 %v1750, %v1746
  %v1791 = vpack.c.b16 %v1751, %v1747
  %v1792 = vpack.c.b16 %v1756, %v1752
  %v1793 = vpack.c.b16 %v1757, %v1753
  %v1794 = vpack.c.b16 %v1758, %v1754
  %v1795 = vpack.c.b16 %v1759, %v1755
  %v1796 = vpack.c.b16 %v1764, %v1760
  %v1797 = vpack.c.b16 %v1765, %v1761
  %v1798 = vpack.c.b16 %v1766, %v1762
  %v1799 = vpack.c.b16 %v1767, %v1763
  %1832 = vmatpush.bf16.msra.mxu0 %v1796
  %1833 = vmatpush.bf16.msra.mxu0 %v1792
  %1834 = vmatpush.bf16.msra.mxu0 %v1788
  %1835 = vmatpush.bf16.msra.mxu0 %v1784
  %1836 = vmatpush.bf16.msra.mxu0 %v1780
  %1837 = vmatpush.bf16.msra.mxu0 %v1776
  %1838 = vmatpush.bf16.msra.mxu0 %v1772
  %1839 = vmatpush.bf16.msra.mxu0 %v1768
  %1840 = vmatmul.bf16.gmra.mxu0 %v1639
  %v1841 = vpop.f32.mrf.mxu0
  %v1842 = vadd.f32 0.0, %v1841
  %v1843 = vpop.f32.mrf.mxu0
  %1844 = vdwg.mxu0
  %1845 = vmatpush.bf16.msra.mxu0 %v1797
  %1846 = vmatpush.bf16.msra.mxu0 %v1793
  %1847 = vmatpush.bf16.msra.mxu0 %v1789
  %1848 = vmatpush.bf16.msra.mxu0 %v1785
  %1849 = vmatpush.bf16.msra.mxu0 %v1781
  %1850 = vmatpush.bf16.msra.mxu0 %v1777
  %1851 = vmatpush.bf16.msra.mxu0 %v1773
  %1852 = vmatpush.bf16.msra.mxu0 %v1769
  %1853 = vmatmul.bf16.gmra.mxu0 %v1639
  %v1854 = vpop.f32.mrf.mxu0
  %v1855 = vadd.f32 0.0, %v1854
  %v1856 = vpop.f32.mrf.mxu0
  %1857 = vdwg.mxu0
  %1858 = vmatpush.bf16.msra.mxu0 %v1798
  %1859 = vmatpush.bf16.msra.mxu0 %v1794
  %1860 = vmatpush.bf16.msra.mxu0 %v1790
  %1861 = vmatpush.bf16.msra.mxu0 %v1786
  %1862 = vmatpush.bf16.msra.mxu0 %v1782
  %1863 = vmatpush.bf16.msra.mxu0 %v1778
  %1864 = vmatpush.bf16.msra.mxu0 %v1774
  %1865 = vmatpush.bf16.msra.mxu0 %v1770
  %1866 = vmatmul.bf16.gmra.mxu0 %v1639
  %v1867 = vpop.f32.mrf.mxu0
  %v1868 = vadd.f32 0.0, %v1867
  %v1869 = vpop.f32.mrf.mxu0
  %1870 = vdwg.mxu0
  %1871 = vmatpush.bf16.msra.mxu0 %v1799
  %1872 = vmatpush.bf16.msra.mxu0 %v1795
  %1873 = vmatpush.bf16.msra.mxu0 %v1791
  %1874 = vmatpush.bf16.msra.mxu0 %v1787
  %1875 = vmatpush.bf16.msra.mxu0 %v1783
  %1876 = vmatpush.bf16.msra.mxu0 %v1779
  %1877 = vmatpush.bf16.msra.mxu0 %v1775
  %1878 = vmatpush.bf16.msra.mxu0 %v1771
  %1879 = vmatmul.bf16.gmra.mxu0 %v1639
  %v1880 = vpop.f32.mrf.mxu0
  %v1881 = vadd.f32 0.0, %v1880
  %v1882 = vpop.f32.mrf.mxu0
  %1883 = vdwg.mxu0
  %v1884 = vadd.f32 %v1635, %v1842
  %v1885 = vadd.f32 %v1636, %v1855
  %v1886 = vadd.f32 %v1637, %v1868
  %v1887 = vadd.f32 %v1638, %v1881
  %v1888 = vxor.u32 %v1884, 2147483648
  %v1889 = vxor.u32 %v1885, 2147483648
  %v1890 = vxor.u32 %v1886, 2147483648
  %v1891 = vmul.f32 %v1888, 1.442695
  %v1892 = vpow.pop %v1891
  %v1893 = vmul.f32 %v1889, 1.442695
  %v1894 = vpow.pop %v1893
  %v1895 = vmul.f32 %v1890, 1.442695
  %v1896 = vpow.pop %v1895
  %v1897 = vadd.f32 %v1892, 1.0
  %v1898 = vadd.f32 %v1894, 1.0
  %v1899 = vadd.f32 %v1896, 1.0
  %v1900 = vrcp.pop %v1897
  %v1901 = vmul.f32 %v1897, %v1900
  %v1902 = vsub.f32 1.0, %v1901
  %v1903 = vmul.f32 %v1900, %v1902
  %v1904 = vadd.f32 %v1900, %v1903
  %vm1905 = vweird.f32 %v1897
  %vm1906 = vweird.f32 %v1900
  %vm1907 = vmor %vm1905, %vm1906
  %v1908 = vsel %vm1907, %v1900, %v1904
  %v1909 = vand.u32 2147483647, %v1897
  %vm1910 = vcmp.eq.f32.partialorder %v1909, 8.507059e+37
  %v1911 = vand.u32 %v1897, 2147483648
  %v1912 = vor.u32 1.1754944e-38, %v1911
  %v1913 = vsel %vm1910, %v1912, %v1908
  %v1914 = vmul.f32 1.0, %v1913
  %v1915 = vrcp.pop %v1898
  %v1916 = vmul.f32 %v1898, %v1915
  %v1917 = vsub.f32 1.0, %v1916
  %v1918 = vmul.f32 %v1915, %v1917
  %v1919 = vadd.f32 %v1915, %v1918
  %vm1920 = vweird.f32 %v1898
  %vm1921 = vweird.f32 %v1915
  %vm1922 = vmor %vm1920, %vm1921
  %v1923 = vsel %vm1922, %v1915, %v1919
  %v1924 = vand.u32 2147483647, %v1898
  %vm1925 = vcmp.eq.f32.partialorder %v1924, 8.507059e+37
  %v1926 = vand.u32 %v1898, 2147483648
  %v1927 = vor.u32 1.1754944e-38, %v1926
  %v1928 = vsel %vm1925, %v1927, %v1923
  %v1929 = vmul.f32 1.0, %v1928
  %v1930 = vrcp.pop %v1899
  %v1931 = vmul.f32 %v1899, %v1930
  %v1932 = vsub.f32 1.0, %v1931
  %v1933 = vmul.f32 %v1930, %v1932
  %v1934 = vadd.f32 %v1930, %v1933
  %vm1935 = vweird.f32 %v1899
  %vm1936 = vweird.f32 %v1930
  %vm1937 = vmor %vm1935, %vm1936
  %v1938 = vsel %vm1937, %v1930, %v1934
  %v1939 = vand.u32 2147483647, %v1899
  %vm1940 = vcmp.eq.f32.partialorder %v1939, 8.507059e+37
  %v1941 = vand.u32 %v1899, 2147483648
  %v1942 = vor.u32 1.1754944e-38, %v1941
  %v1943 = vsel %vm1940, %v1942, %v1938
  %v1944 = vmul.f32 1.0, %v1943
  %v1945 = vtanh.pop %v1887
  %v1946 = vmul.f32 %v1929, %v1627
  %v1947 = vmul.f32 %v1914, %v1945
  %v1948 = vadd.f32 %v1946, %v1947
  %v1949 = vtanh.pop %v1948
  %v1950 = vmul.f32 %v1944, %v1949
  %s1951 = scalar_lea.vmem [#allocation2], 40
  %1952 = vst [vmem:[%s1951] sm:$0xff] %v1950
  %s1953 = smul.u32 6, 4
  %s1954 = smul.addr %s1953, 8
  %s1955 = scalar_lea.vmem %s0, %s1954
  %v1956 = vld [vmem:[%s1955] sm:$0xff]
  %v1957 = vld [vmem:[%s1955 + $0x8] sm:$0xff]
  %v1958 = vld [vmem:[%s1955 + $0x10] sm:$0xff]
  %v1959 = vld [vmem:[%s1955 + $0x18] sm:$0xff]
  %v1960 = vpack.c.bf16 %v1950, %v1950
  %v1961 = vld [vmem:[%s1] sm:$0xff]
  %v1962 = vld [vmem:[%s1 + $0x8] sm:$0xff]
  %v1963 = vld [vmem:[%s1 + $0x10] sm:$0xff]
  %v1964 = vld [vmem:[%s1 + $0x18] sm:$0xff]
  %v1965 = vld [vmem:[%s1 + $0x20] sm:$0xff]
  %v1966 = vld [vmem:[%s1 + $0x28] sm:$0xff]
  %v1967 = vld [vmem:[%s1 + $0x30] sm:$0xff]
  %v1968 = vld [vmem:[%s1 + $0x38] sm:$0xff]
  %v1969 = vld [vmem:[%s1 + $0x40] sm:$0xff]
  %v1970 = vld [vmem:[%s1 + $0x48] sm:$0xff]
  %v1971 = vld [vmem:[%s1 + $0x50] sm:$0xff]
  %v1972 = vld [vmem:[%s1 + $0x58] sm:$0xff]
  %v1973 = vld [vmem:[%s1 + $0x60] sm:$0xff]
  %v1974 = vld [vmem:[%s1 + $0x68] sm:$0xff]
  %v1975 = vld [vmem:[%s1 + $0x70] sm:$0xff]
  %v1976 = vld [vmem:[%s1 + $0x78] sm:$0xff]
  %v1977 = vld [vmem:[%s1 + $0x80] sm:$0xff]
  %v1978 = vld [vmem:[%s1 + $0x88] sm:$0xff]
  %v1979 = vld [vmem:[%s1 + $0x90] sm:$0xff]
  %v1980 = vld [vmem:[%s1 + $0x98] sm:$0xff]
  %v1981 = vld [vmem:[%s1 + $0xa0] sm:$0xff]
  %v1982 = vld [vmem:[%s1 + $0xa8] sm:$0xff]
  %v1983 = vld [vmem:[%s1 + $0xb0] sm:$0xff]
  %v1984 = vld [vmem:[%s1 + $0xb8] sm:$0xff]
  %v1985 = vld [vmem:[%s1 + $0xc0] sm:$0xff]
  %v1986 = vld [vmem:[%s1 + $0xc8] sm:$0xff]
  %v1987 = vld [vmem:[%s1 + $0xd0] sm:$0xff]
  %v1988 = vld [vmem:[%s1 + $0xd8] sm:$0xff]
  %v1989 = vld [vmem:[%s1 + $0xe0] sm:$0xff]
  %v1990 = vld [vmem:[%s1 + $0xe8] sm:$0xff]
  %v1991 = vld [vmem:[%s1 + $0xf0] sm:$0xff]
  %v1992 = vld [vmem:[%s1 + $0xf8] sm:$0xff]
  %v2025 = vunpack.c.l.b16 %v1961
  %v2026 = vunpack.c.h.b16 %v1961
  %v2027 = vunpack.c.l.b16 %v1962
  %v2028 = vunpack.c.h.b16 %v1962
  %v2029 = vunpack.c.l.b16 %v1963
  %v2030 = vunpack.c.h.b16 %v1963
  %v2031 = vunpack.c.l.b16 %v1964
  %v2032 = vunpack.c.h.b16 %v1964
  %v2033 = vunpack.c.l.b16 %v1965
  %v2034 = vunpack.c.h.b16 %v1965
  %v2035 = vunpack.c.l.b16 %v1966
  %v2036 = vunpack.c.h.b16 %v1966
  %v2037 = vunpack.c.l.b16 %v1967
  %v2038 = vunpack.c.h.b16 %v1967
  %v2039 = vunpack.c.l.b16 %v1968
  %v2040 = vunpack.c.h.b16 %v1968
  %v2041 = vunpack.c.l.b16 %v1969
  %v2042 = vunpack.c.h.b16 %v1969
  %v2043 = vunpack.c.l.b16 %v1970
  %v2044 = vunpack.c.h.b16 %v1970
  %v2045 = vunpack.c.l.b16 %v1971
  %v2046 = vunpack.c.h.b16 %v1971
  %v2047 = vunpack.c.l.b16 %v1972
  %v2048 = vunpack.c.h.b16 %v1972
  %v2049 = vunpack.c.l.b16 %v1973
  %v2050 = vunpack.c.h.b16 %v1973
  %v2051 = vunpack.c.l.b16 %v1974
  %v2052 = vunpack.c.h.b16 %v1974
  %v2053 = vunpack.c.l.b16 %v1975
  %v2054 = vunpack.c.h.b16 %v1975
  %v2055 = vunpack.c.l.b16 %v1976
  %v2056 = vunpack.c.h.b16 %v1976
  %v2057 = vunpack.c.l.b16 %v1977
  %v2058 = vunpack.c.h.b16 %v1977
  %v2059 = vunpack.c.l.b16 %v1978
  %v2060 = vunpack.c.h.b16 %v1978
  %v2061 = vunpack.c.l.b16 %v1979
  %v2062 = vunpack.c.h.b16 %v1979
  %v2063 = vunpack.c.l.b16 %v1980
  %v2064 = vunpack.c.h.b16 %v1980
  %v2065 = vunpack.c.l.b16 %v1981
  %v2066 = vunpack.c.h.b16 %v1981
  %v2067 = vunpack.c.l.b16 %v1982
  %v2068 = vunpack.c.h.b16 %v1982
  %v2069 = vunpack.c.l.b16 %v1983
  %v2070 = vunpack.c.h.b16 %v1983
  %v2071 = vunpack.c.l.b16 %v1984
  %v2072 = vunpack.c.h.b16 %v1984
  %v2073 = vunpack.c.l.b16 %v1985
  %v2074 = vunpack.c.h.b16 %v1985
  %v2075 = vunpack.c.l.b16 %v1986
  %v2076 = vunpack.c.h.b16 %v1986
  %v2077 = vunpack.c.l.b16 %v1987
  %v2078 = vunpack.c.h.b16 %v1987
  %v2079 = vunpack.c.l.b16 %v1988
  %v2080 = vunpack.c.h.b16 %v1988
  %v2081 = vunpack.c.l.b16 %v1989
  %v2082 = vunpack.c.h.b16 %v1989
  %v2083 = vunpack.c.l.b16 %v1990
  %v2084 = vunpack.c.h.b16 %v1990
  %v2085 = vunpack.c.l.b16 %v1991
  %v2086 = vunpack.c.h.b16 %v1991
  %v2087 = vunpack.c.l.b16 %v1992
  %v2088 = vunpack.c.h.b16 %v1992
  %v2089 = vpack.c.b16 %v2029, %v2025
  %v2090 = vpack.c.b16 %v2030, %v2026
  %v2091 = vpack.c.b16 %v2031, %v2027
  %v2092 = vpack.c.b16 %v2032, %v2028
  %v2093 = vpack.c.b16 %v2037, %v2033
  %v2094 = vpack.c.b16 %v2038, %v2034
  %v2095 = vpack.c.b16 %v2039, %v2035
  %v2096 = vpack.c.b16 %v2040, %v2036
  %v2097 = vpack.c.b16 %v2045, %v2041
  %v2098 = vpack.c.b16 %v2046, %v2042
  %v2099 = vpack.c.b16 %v2047, %v2043
  %v2100 = vpack.c.b16 %v2048, %v2044
  %v2101 = vpack.c.b16 %v2053, %v2049
  %v2102 = vpack.c.b16 %v2054, %v2050
  %v2103 = vpack.c.b16 %v2055, %v2051
  %v2104 = vpack.c.b16 %v2056, %v2052
  %v2105 = vpack.c.b16 %v2061, %v2057
  %v2106 = vpack.c.b16 %v2062, %v2058
  %v2107 = vpack.c.b16 %v2063, %v2059
  %v2108 = vpack.c.b16 %v2064, %v2060
  %v2109 = vpack.c.b16 %v2069, %v2065
  %v2110 = vpack.c.b16 %v2070, %v2066
  %v2111 = vpack.c.b16 %v2071, %v2067
  %v2112 = vpack.c.b16 %v2072, %v2068
  %v2113 = vpack.c.b16 %v2077, %v2073
  %v2114 = vpack.c.b16 %v2078, %v2074
  %v2115 = vpack.c.b16 %v2079, %v2075
  %v2116 = vpack.c.b16 %v2080, %v2076
  %v2117 = vpack.c.b16 %v2085, %v2081
  %v2118 = vpack.c.b16 %v2086, %v2082
  %v2119 = vpack.c.b16 %v2087, %v2083
  %v2120 = vpack.c.b16 %v2088, %v2084
  %2153 = vmatpush.bf16.msra.mxu0 %v2117
  %2154 = vmatpush.bf16.msra.mxu0 %v2113
  %2155 = vmatpush.bf16.msra.mxu0 %v2109
  %2156 = vmatpush.bf16.msra.mxu0 %v2105
  %2157 = vmatpush.bf16.msra.mxu0 %v2101
  %2158 = vmatpush.bf16.msra.mxu0 %v2097
  %2159 = vmatpush.bf16.msra.mxu0 %v2093
  %2160 = vmatpush.bf16.msra.mxu0 %v2089
  %2161 = vmatmul.bf16.gmra.mxu0 %v1960
  %v2162 = vpop.f32.mrf.mxu0
  %v2163 = vadd.f32 0.0, %v2162
  %v2164 = vpop.f32.mrf.mxu0
  %2165 = vdwg.mxu0
  %2166 = vmatpush.bf16.msra.mxu0 %v2118
  %2167 = vmatpush.bf16.msra.mxu0 %v2114
  %2168 = vmatpush.bf16.msra.mxu0 %v2110
  %2169 = vmatpush.bf16.msra.mxu0 %v2106
  %2170 = vmatpush.bf16.msra.mxu0 %v2102
  %2171 = vmatpush.bf16.msra.mxu0 %v2098
  %2172 = vmatpush.bf16.msra.mxu0 %v2094
  %2173 = vmatpush.bf16.msra.mxu0 %v2090
  %2174 = vmatmul.bf16.gmra.mxu0 %v1960
  %v2175 = vpop.f32.mrf.mxu0
  %v2176 = vadd.f32 0.0, %v2175
  %v2177 = vpop.f32.mrf.mxu0
  %2178 = vdwg.mxu0
  %2179 = vmatpush.bf16.msra.mxu0 %v2119
  %2180 = vmatpush.bf16.msra.mxu0 %v2115
  %2181 = vmatpush.bf16.msra.mxu0 %v2111
  %2182 = vmatpush.bf16.msra.mxu0 %v2107
  %2183 = vmatpush.bf16.msra.mxu0 %v2103
  %2184 = vmatpush.bf16.msra.mxu0 %v2099
  %2185 = vmatpush.bf16.msra.mxu0 %v2095
  %2186 = vmatpush.bf16.msra.mxu0 %v2091
  %2187 = vmatmul.bf16.gmra.mxu0 %v1960
  %v2188 = vpop.f32.mrf.mxu0
  %v2189 = vadd.f32 0.0, %v2188
  %v2190 = vpop.f32.mrf.mxu0
  %2191 = vdwg.mxu0
  %2192 = vmatpush.bf16.msra.mxu0 %v2120
  %2193 = vmatpush.bf16.msra.mxu0 %v2116
  %2194 = vmatpush.bf16.msra.mxu0 %v2112
  %2195 = vmatpush.bf16.msra.mxu0 %v2108
  %2196 = vmatpush.bf16.msra.mxu0 %v2104
  %2197 = vmatpush.bf16.msra.mxu0 %v2100
  %2198 = vmatpush.bf16.msra.mxu0 %v2096
  %2199 = vmatpush.bf16.msra.mxu0 %v2092
  %2200 = vmatmul.bf16.gmra.mxu0 %v1960
  %v2201 = vpop.f32.mrf.mxu0
  %v2202 = vadd.f32 0.0, %v2201
  %v2203 = vpop.f32.mrf.mxu0
  %2204 = vdwg.mxu0
  %v2205 = vadd.f32 %v1956, %v2163
  %v2206 = vadd.f32 %v1957, %v2176
  %v2207 = vadd.f32 %v1958, %v2189
  %v2208 = vadd.f32 %v1959, %v2202
  %v2209 = vxor.u32 %v2205, 2147483648
  %v2210 = vxor.u32 %v2206, 2147483648
  %v2211 = vxor.u32 %v2207, 2147483648
  %v2212 = vmul.f32 %v2209, 1.442695
  %v2213 = vpow.pop %v2212
  %v2214 = vmul.f32 %v2210, 1.442695
  %v2215 = vpow.pop %v2214
  %v2216 = vmul.f32 %v2211, 1.442695
  %v2217 = vpow.pop %v2216
  %v2218 = vadd.f32 %v2213, 1.0
  %v2219 = vadd.f32 %v2215, 1.0
  %v2220 = vadd.f32 %v2217, 1.0
  %v2221 = vrcp.pop %v2218
  %v2222 = vmul.f32 %v2218, %v2221
  %v2223 = vsub.f32 1.0, %v2222
  %v2224 = vmul.f32 %v2221, %v2223
  %v2225 = vadd.f32 %v2221, %v2224
  %vm2226 = vweird.f32 %v2218
  %vm2227 = vweird.f32 %v2221
  %vm2228 = vmor %vm2226, %vm2227
  %v2229 = vsel %vm2228, %v2221, %v2225
  %v2230 = vand.u32 2147483647, %v2218
  %vm2231 = vcmp.eq.f32.partialorder %v2230, 8.507059e+37
  %v2232 = vand.u32 %v2218, 2147483648
  %v2233 = vor.u32 1.1754944e-38, %v2232
  %v2234 = vsel %vm2231, %v2233, %v2229
  %v2235 = vmul.f32 1.0, %v2234
  %v2236 = vrcp.pop %v2219
  %v2237 = vmul.f32 %v2219, %v2236
  %v2238 = vsub.f32 1.0, %v2237
  %v2239 = vmul.f32 %v2236, %v2238
  %v2240 = vadd.f32 %v2236, %v2239
  %vm2241 = vweird.f32 %v2219
  %vm2242 = vweird.f32 %v2236
  %vm2243 = vmor %vm2241, %vm2242
  %v2244 = vsel %vm2243, %v2236, %v2240
  %v2245 = vand.u32 2147483647, %v2219
  %vm2246 = vcmp.eq.f32.partialorder %v2245, 8.507059e+37
  %v2247 = vand.u32 %v2219, 2147483648
  %v2248 = vor.u32 1.1754944e-38, %v2247
  %v2249 = vsel %vm2246, %v2248, %v2244
  %v2250 = vmul.f32 1.0, %v2249
  %v2251 = vrcp.pop %v2220
  %v2252 = vmul.f32 %v2220, %v2251
  %v2253 = vsub.f32 1.0, %v2252
  %v2254 = vmul.f32 %v2251, %v2253
  %v2255 = vadd.f32 %v2251, %v2254
  %vm2256 = vweird.f32 %v2220
  %vm2257 = vweird.f32 %v2251
  %vm2258 = vmor %vm2256, %vm2257
  %v2259 = vsel %vm2258, %v2251, %v2255
  %v2260 = vand.u32 2147483647, %v2220
  %vm2261 = vcmp.eq.f32.partialorder %v2260, 8.507059e+37
  %v2262 = vand.u32 %v2220, 2147483648
  %v2263 = vor.u32 1.1754944e-38, %v2262
  %v2264 = vsel %vm2261, %v2263, %v2259
  %v2265 = vmul.f32 1.0, %v2264
  %v2266 = vtanh.pop %v2208
  %v2267 = vmul.f32 %v2250, %v1948
  %v2268 = vmul.f32 %v2235, %v2266
  %v2269 = vadd.f32 %v2267, %v2268
  %v2270 = vtanh.pop %v2269
  %v2271 = vmul.f32 %v2265, %v2270
  %s2272 = scalar_lea.vmem [#allocation2], 48
  %2273 = vst [vmem:[%s2272] sm:$0xff] %v2271
  %s2274 = smul.u32 7, 4
  %s2275 = smul.addr %s2274, 8
  %s2276 = scalar_lea.vmem %s0, %s2275
  %v2277 = vld [vmem:[%s2276] sm:$0xff]
  %v2278 = vld [vmem:[%s2276 + $0x8] sm:$0xff]
  %v2279 = vld [vmem:[%s2276 + $0x10] sm:$0xff]
  %v2280 = vld [vmem:[%s2276 + $0x18] sm:$0xff]
  %v2281 = vpack.c.bf16 %v2271, %v2271
  %v2282 = vld [vmem:[%s1] sm:$0xff]
  %v2283 = vld [vmem:[%s1 + $0x8] sm:$0xff]
  %v2284 = vld [vmem:[%s1 + $0x10] sm:$0xff]
  %v2285 = vld [vmem:[%s1 + $0x18] sm:$0xff]
  %v2286 = vld [vmem:[%s1 + $0x20] sm:$0xff]
  %v2287 = vld [vmem:[%s1 + $0x28] sm:$0xff]
  %v2288 = vld [vmem:[%s1 + $0x30] sm:$0xff]
  %v2289 = vld [vmem:[%s1 + $0x38] sm:$0xff]
  %v2290 = vld [vmem:[%s1 + $0x40] sm:$0xff]
  %v2291 = vld [vmem:[%s1 + $0x48] sm:$0xff]
  %v2292 = vld [vmem:[%s1 + $0x50] sm:$0xff]
  %v2293 = vld [vmem:[%s1 + $0x58] sm:$0xff]
  %v2294 = vld [vmem:[%s1 + $0x60] sm:$0xff]
  %v2295 = vld [vmem:[%s1 + $0x68] sm:$0xff]
  %v2296 = vld [vmem:[%s1 + $0x70] sm:$0xff]
  %v2297 = vld [vmem:[%s1 + $0x78] sm:$0xff]
  %v2298 = vld [vmem:[%s1 + $0x80] sm:$0xff]
  %v2299 = vld [vmem:[%s1 + $0x88] sm:$0xff]
  %v2300 = vld [vmem:[%s1 + $0x90] sm:$0xff]
  %v2301 = vld [vmem:[%s1 + $0x98] sm:$0xff]
  %v2302 = vld [vmem:[%s1 + $0xa0] sm:$0xff]
  %v2303 = vld [vmem:[%s1 + $0xa8] sm:$0xff]
  %v2304 = vld [vmem:[%s1 + $0xb0] sm:$0xff]
  %v2305 = vld [vmem:[%s1 + $0xb8] sm:$0xff]
  %v2306 = vld [vmem:[%s1 + $0xc0] sm:$0xff]
  %v2307 = vld [vmem:[%s1 + $0xc8] sm:$0xff]
  %v2308 = vld [vmem:[%s1 + $0xd0] sm:$0xff]
  %v2309 = vld [vmem:[%s1 + $0xd8] sm:$0xff]
  %v2310 = vld [vmem:[%s1 + $0xe0] sm:$0xff]
  %v2311 = vld [vmem:[%s1 + $0xe8] sm:$0xff]
  %v2312 = vld [vmem:[%s1 + $0xf0] sm:$0xff]
  %v2313 = vld [vmem:[%s1 + $0xf8] sm:$0xff]
  %v2346 = vunpack.c.l.b16 %v2282
  %v2347 = vunpack.c.h.b16 %v2282
  %v2348 = vunpack.c.l.b16 %v2283
  %v2349 = vunpack.c.h.b16 %v2283
  %v2350 = vunpack.c.l.b16 %v2284
  %v2351 = vunpack.c.h.b16 %v2284
  %v2352 = vunpack.c.l.b16 %v2285
  %v2353 = vunpack.c.h.b16 %v2285
  %v2354 = vunpack.c.l.b16 %v2286
  %v2355 = vunpack.c.h.b16 %v2286
  %v2356 = vunpack.c.l.b16 %v2287
  %v2357 = vunpack.c.h.b16 %v2287
  %v2358 = vunpack.c.l.b16 %v2288
  %v2359 = vunpack.c.h.b16 %v2288
  %v2360 = vunpack.c.l.b16 %v2289
  %v2361 = vunpack.c.h.b16 %v2289
  %v2362 = vunpack.c.l.b16 %v2290
  %v2363 = vunpack.c.h.b16 %v2290
  %v2364 = vunpack.c.l.b16 %v2291
  %v2365 = vunpack.c.h.b16 %v2291
  %v2366 = vunpack.c.l.b16 %v2292
  %v2367 = vunpack.c.h.b16 %v2292
  %v2368 = vunpack.c.l.b16 %v2293
  %v2369 = vunpack.c.h.b16 %v2293
  %v2370 = vunpack.c.l.b16 %v2294
  %v2371 = vunpack.c.h.b16 %v2294
  %v2372 = vunpack.c.l.b16 %v2295
  %v2373 = vunpack.c.h.b16 %v2295
  %v2374 = vunpack.c.l.b16 %v2296
  %v2375 = vunpack.c.h.b16 %v2296
  %v2376 = vunpack.c.l.b16 %v2297
  %v2377 = vunpack.c.h.b16 %v2297
  %v2378 = vunpack.c.l.b16 %v2298
  %v2379 = vunpack.c.h.b16 %v2298
  %v2380 = vunpack.c.l.b16 %v2299
  %v2381 = vunpack.c.h.b16 %v2299
  %v2382 = vunpack.c.l.b16 %v2300
  %v2383 = vunpack.c.h.b16 %v2300
  %v2384 = vunpack.c.l.b16 %v2301
  %v2385 = vunpack.c.h.b16 %v2301
  %v2386 = vunpack.c.l.b16 %v2302
  %v2387 = vunpack.c.h.b16 %v2302
  %v2388 = vunpack.c.l.b16 %v2303
  %v2389 = vunpack.c.h.b16 %v2303
  %v2390 = vunpack.c.l.b16 %v2304
  %v2391 = vunpack.c.h.b16 %v2304
  %v2392 = vunpack.c.l.b16 %v2305
  %v2393 = vunpack.c.h.b16 %v2305
  %v2394 = vunpack.c.l.b16 %v2306
  %v2395 = vunpack.c.h.b16 %v2306
  %v2396 = vunpack.c.l.b16 %v2307
  %v2397 = vunpack.c.h.b16 %v2307
  %v2398 = vunpack.c.l.b16 %v2308
  %v2399 = vunpack.c.h.b16 %v2308
  %v2400 = vunpack.c.l.b16 %v2309
  %v2401 = vunpack.c.h.b16 %v2309
  %v2402 = vunpack.c.l.b16 %v2310
  %v2403 = vunpack.c.h.b16 %v2310
  %v2404 = vunpack.c.l.b16 %v2311
  %v2405 = vunpack.c.h.b16 %v2311
  %v2406 = vunpack.c.l.b16 %v2312
  %v2407 = vunpack.c.h.b16 %v2312
  %v2408 = vunpack.c.l.b16 %v2313
  %v2409 = vunpack.c.h.b16 %v2313
  %v2410 = vpack.c.b16 %v2350, %v2346
  %v2411 = vpack.c.b16 %v2351, %v2347
  %v2412 = vpack.c.b16 %v2352, %v2348
  %v2413 = vpack.c.b16 %v2353, %v2349
  %v2414 = vpack.c.b16 %v2358, %v2354
  %v2415 = vpack.c.b16 %v2359, %v2355
  %v2416 = vpack.c.b16 %v2360, %v2356
  %v2417 = vpack.c.b16 %v2361, %v2357
  %v2418 = vpack.c.b16 %v2366, %v2362
  %v2419 = vpack.c.b16 %v2367, %v2363
  %v2420 = vpack.c.b16 %v2368, %v2364
  %v2421 = vpack.c.b16 %v2369, %v2365
  %v2422 = vpack.c.b16 %v2374, %v2370
  %v2423 = vpack.c.b16 %v2375, %v2371
  %v2424 = vpack.c.b16 %v2376, %v2372
  %v2425 = vpack.c.b16 %v2377, %v2373
  %v2426 = vpack.c.b16 %v2382, %v2378
  %v2427 = vpack.c.b16 %v2383, %v2379
  %v2428 = vpack.c.b16 %v2384, %v2380
  %v2429 = vpack.c.b16 %v2385, %v2381
  %v2430 = vpack.c.b16 %v2390, %v2386
  %v2431 = vpack.c.b16 %v2391, %v2387
  %v2432 = vpack.c.b16 %v2392, %v2388
  %v2433 = vpack.c.b16 %v2393, %v2389
  %v2434 = vpack.c.b16 %v2398, %v2394
  %v2435 = vpack.c.b16 %v2399, %v2395
  %v2436 = vpack.c.b16 %v2400, %v2396
  %v2437 = vpack.c.b16 %v2401, %v2397
  %v2438 = vpack.c.b16 %v2406, %v2402
  %v2439 = vpack.c.b16 %v2407, %v2403
  %v2440 = vpack.c.b16 %v2408, %v2404
  %v2441 = vpack.c.b16 %v2409, %v2405
  %2474 = vmatpush.bf16.msra.mxu0 %v2438
  %2475 = vmatpush.bf16.msra.mxu0 %v2434
  %2476 = vmatpush.bf16.msra.mxu0 %v2430
  %2477 = vmatpush.bf16.msra.mxu0 %v2426
  %2478 = vmatpush.bf16.msra.mxu0 %v2422
  %2479 = vmatpush.bf16.msra.mxu0 %v2418
  %2480 = vmatpush.bf16.msra.mxu0 %v2414
  %2481 = vmatpush.bf16.msra.mxu0 %v2410
  %2482 = vmatmul.bf16.gmra.mxu0 %v2281
  %v2483 = vpop.f32.mrf.mxu0
  %v2484 = vadd.f32 0.0, %v2483
  %v2485 = vpop.f32.mrf.mxu0
  %2486 = vdwg.mxu0
  %2487 = vmatpush.bf16.msra.mxu0 %v2439
  %2488 = vmatpush.bf16.msra.mxu0 %v2435
  %2489 = vmatpush.bf16.msra.mxu0 %v2431
  %2490 = vmatpush.bf16.msra.mxu0 %v2427
  %2491 = vmatpush.bf16.msra.mxu0 %v2423
  %2492 = vmatpush.bf16.msra.mxu0 %v2419
  %2493 = vmatpush.bf16.msra.mxu0 %v2415
  %2494 = vmatpush.bf16.msra.mxu0 %v2411
  %2495 = vmatmul.bf16.gmra.mxu0 %v2281
  %v2496 = vpop.f32.mrf.mxu0
  %v2497 = vadd.f32 0.0, %v2496
  %v2498 = vpop.f32.mrf.mxu0
  %2499 = vdwg.mxu0
  %2500 = vmatpush.bf16.msra.mxu0 %v2440
  %2501 = vmatpush.bf16.msra.mxu0 %v2436
  %2502 = vmatpush.bf16.msra.mxu0 %v2432
  %2503 = vmatpush.bf16.msra.mxu0 %v2428
  %2504 = vmatpush.bf16.msra.mxu0 %v2424
  %2505 = vmatpush.bf16.msra.mxu0 %v2420
  %2506 = vmatpush.bf16.msra.mxu0 %v2416
  %2507 = vmatpush.bf16.msra.mxu0 %v2412
  %2508 = vmatmul.bf16.gmra.mxu0 %v2281
  %v2509 = vpop.f32.mrf.mxu0
  %v2510 = vadd.f32 0.0, %v2509
  %v2511 = vpop.f32.mrf.mxu0
  %2512 = vdwg.mxu0
  %2513 = vmatpush.bf16.msra.mxu0 %v2441
  %2514 = vmatpush.bf16.msra.mxu0 %v2437
  %2515 = vmatpush.bf16.msra.mxu0 %v2433
  %2516 = vmatpush.bf16.msra.mxu0 %v2429
  %2517 = vmatpush.bf16.msra.mxu0 %v2425
  %2518 = vmatpush.bf16.msra.mxu0 %v2421
  %2519 = vmatpush.bf16.msra.mxu0 %v2417
  %2520 = vmatpush.bf16.msra.mxu0 %v2413
  %2521 = vmatmul.bf16.gmra.mxu0 %v2281
  %v2522 = vpop.f32.mrf.mxu0
  %v2523 = vadd.f32 0.0, %v2522
  %v2524 = vpop.f32.mrf.mxu0
  %2525 = vdwg.mxu0
  %v2526 = vadd.f32 %v2277, %v2484
  %v2527 = vadd.f32 %v2278, %v2497
  %v2528 = vadd.f32 %v2279, %v2510
  %v2529 = vadd.f32 %v2280, %v2523
  %v2530 = vxor.u32 %v2526, 2147483648
  %v2531 = vxor.u32 %v2527, 2147483648
  %v2532 = vxor.u32 %v2528, 2147483648
  %v2533 = vmul.f32 %v2530, 1.442695
  %v2534 = vpow.pop %v2533
  %v2535 = vmul.f32 %v2531, 1.442695
  %v2536 = vpow.pop %v2535
  %v2537 = vmul.f32 %v2532, 1.442695
  %v2538 = vpow.pop %v2537
  %v2539 = vadd.f32 %v2534, 1.0
  %v2540 = vadd.f32 %v2536, 1.0
  %v2541 = vadd.f32 %v2538, 1.0
  %v2542 = vrcp.pop %v2539
  %v2543 = vmul.f32 %v2539, %v2542
  %v2544 = vsub.f32 1.0, %v2543
  %v2545 = vmul.f32 %v2542, %v2544
  %v2546 = vadd.f32 %v2542, %v2545
  %vm2547 = vweird.f32 %v2539
  %vm2548 = vweird.f32 %v2542
  %vm2549 = vmor %vm2547, %vm2548
  %v2550 = vsel %vm2549, %v2542, %v2546
  %v2551 = vand.u32 2147483647, %v2539
  %vm2552 = vcmp.eq.f32.partialorder %v2551, 8.507059e+37
  %v2553 = vand.u32 %v2539, 2147483648
  %v2554 = vor.u32 1.1754944e-38, %v2553
  %v2555 = vsel %vm2552, %v2554, %v2550
  %v2556 = vmul.f32 1.0, %v2555
  %v2557 = vrcp.pop %v2540
  %v2558 = vmul.f32 %v2540, %v2557
  %v2559 = vsub.f32 1.0, %v2558
  %v2560 = vmul.f32 %v2557, %v2559
  %v2561 = vadd.f32 %v2557, %v2560
  %vm2562 = vweird.f32 %v2540
  %vm2563 = vweird.f32 %v2557
  %vm2564 = vmor %vm2562, %vm2563
  %v2565 = vsel %vm2564, %v2557, %v2561
  %v2566 = vand.u32 2147483647, %v2540
  %vm2567 = vcmp.eq.f32.partialorder %v2566, 8.507059e+37
  %v2568 = vand.u32 %v2540, 2147483648
  %v2569 = vor.u32 1.1754944e-38, %v2568
  %v2570 = vsel %vm2567, %v2569, %v2565
  %v2571 = vmul.f32 1.0, %v2570
  %v2572 = vrcp.pop %v2541
  %v2573 = vmul.f32 %v2541, %v2572
  %v2574 = vsub.f32 1.0, %v2573
  %v2575 = vmul.f32 %v2572, %v2574
  %v2576 = vadd.f32 %v2572, %v2575
  %vm2577 = vweird.f32 %v2541
  %vm2578 = vweird.f32 %v2572
  %vm2579 = vmor %vm2577, %vm2578
  %v2580 = vsel %vm2579, %v2572, %v2576
  %v2581 = vand.u32 2147483647, %v2541
  %vm2582 = vcmp.eq.f32.partialorder %v2581, 8.507059e+37
  %v2583 = vand.u32 %v2541, 2147483648
  %v2584 = vor.u32 1.1754944e-38, %v2583
  %v2585 = vsel %vm2582, %v2584, %v2580
  %v2586 = vmul.f32 1.0, %v2585
  %v2587 = vtanh.pop %v2529
  %v2588 = vmul.f32 %v2571, %v2269
  %v2589 = vmul.f32 %v2556, %v2587
  %v2590 = vadd.f32 %v2588, %v2589
  %v2591 = vtanh.pop %v2590
  %v2592 = vmul.f32 %v2586, %v2591
  %s2593 = scalar_lea.vmem [#allocation2], 56
  %2594 = vst [vmem:[%s2593] sm:$0xff] %v2592
  %2595 = vst [vmem:[%s7] sm:$0xff] %v2592
  %2596 = vst [vmem:[%s8] sm:$0xff] %v2590
  %v2597 = vld [vmem:[#allocation2] sm:$0xff]
  %v2598 = vld [vmem:[#allocation2 + $0x8] sm:$0xff]
  %v2599 = vld [vmem:[#allocation2 + $0x10] sm:$0xff]
  %v2600 = vld [vmem:[#allocation2 + $0x18] sm:$0xff]
  %v2601 = vld [vmem:[#allocation2 + $0x20] sm:$0xff]
  %v2602 = vld [vmem:[#allocation2 + $0x28] sm:$0xff]
  %v2603 = vld [vmem:[#allocation2 + $0x30] sm:$0xff]
  %v2604 = vld [vmem:[#allocation2 + $0x38] sm:$0xff]
  %v2605 = vld [vmem:[%s2] sm:$0xff]
  %v2606 = vld [vmem:[%s2 + $0x8] sm:$0xff]
  %v2607 = vld [vmem:[%s2 + $0x10] sm:$0xff]
  %v2608 = vld [vmem:[%s2 + $0x18] sm:$0xff]
  %v2609 = vld [vmem:[%s2 + $0x20] sm:$0xff]
  %v2610 = vld [vmem:[%s2 + $0x28] sm:$0xff]
  %v2611 = vld [vmem:[%s2 + $0x30] sm:$0xff]
  %v2612 = vld [vmem:[%s2 + $0x38] sm:$0xff]
  %v2613 = vld [vmem:[%s2 + $0x40] sm:$0xff]
  %v2614 = vld [vmem:[%s2 + $0x48] sm:$0xff]
  %v2615 = vld [vmem:[%s2 + $0x50] sm:$0xff]
  %v2616 = vld [vmem:[%s2 + $0x58] sm:$0xff]
  %v2617 = vld [vmem:[%s2 + $0x60] sm:$0xff]
  %v2618 = vld [vmem:[%s2 + $0x68] sm:$0xff]
  %v2619 = vld [vmem:[%s2 + $0x70] sm:$0xff]
  %v2620 = vld [vmem:[%s2 + $0x78] sm:$0xff]
  %v2621 = vld [vmem:[%s3] sm:$0x1]
  %v2623 = vperm.slane %v2621, 0
  %2625 = vmatpush.msra.mxu0 %v2620
  %2626 = vmatpush.msra.mxu0 %v2619
  %2627 = vmatpush.msra.mxu0 %v2618
  %2628 = vmatpush.msra.mxu0 %v2617
  %2629 = vmatpush.msra.mxu0 %v2616
  %2630 = vmatpush.msra.mxu0 %v2615
  %2631 = vmatpush.msra.mxu0 %v2614
  %2632 = vmatpush.msra.mxu0 %v2613
  %2633 = vmatpush.msra.mxu0 %v2612
  %2634 = vmatpush.msra.mxu0 %v2611
  %2635 = vmatpush.msra.mxu0 %v2610
  %2636 = vmatpush.msra.mxu0 %v2609
  %2637 = vmatpush.msra.mxu0 %v2608
  %2638 = vmatpush.msra.mxu0 %v2607
  %2639 = vmatpush.msra.mxu0 %v2606
  %2640 = vmatpush.msra.mxu0 %v2605
  %2641 = vmatmul.f32.gmra.mxu0 %v2597
  %v2642 = vpop.f32.mrf.mxu0
  %v2643 = vadd.f32 %v2623, %v2642
  %2644 = vmatmul.f32.gmra.mxu0 %v2598
  %v2645 = vpop.f32.mrf.mxu0
  %v2646 = vadd.f32 %v2623, %v2645
  %2647 = vmatmul.f32.gmra.mxu0 %v2599
  %v2648 = vpop.f32.mrf.mxu0
  %v2649 = vadd.f32 %v2623, %v2648
  %2650 = vmatmul.f32.gmra.mxu0 %v2600
  %v2651 = vpop.f32.mrf.mxu0
  %v2652 = vadd.f32 %v2623, %v2651
  %2653 = vmatmul.f32.gmra.mxu0 %v2601
  %v2654 = vpop.f32.mrf.mxu0
  %v2655 = vadd.f32 %v2623, %v2654
  %2656 = vmatmul.f32.gmra.mxu0 %v2602
  %v2657 = vpop.f32.mrf.mxu0
  %v2658 = vadd.f32 %v2623, %v2657
  %2659 = vmatmul.f32.gmra.mxu0 %v2603
  %v2660 = vpop.f32.mrf.mxu0
  %v2661 = vadd.f32 %v2623, %v2660
  %2662 = vmatmul.f32.gmra.mxu0 %v2604
  %v2663 = vpop.f32.mrf.mxu0
  %v2664 = vadd.f32 %v2623, %v2663
  %2665 = vdwg.mxu0
  %2666 = vst [vmem:[%s6] sm:$0xff] %v2643
  %2667 = vst [vmem:[%s6 + $0x8] sm:$0xff] %v2646
  %2668 = vst [vmem:[%s6 + $0x10] sm:$0xff] %v2649
  %2669 = vst [vmem:[%s6 + $0x18] sm:$0xff] %v2652
  %2670 = vst [vmem:[%s6 + $0x20] sm:$0xff] %v2655
  %2671 = vst [vmem:[%s6 + $0x28] sm:$0xff] %v2658
  %2672 = vst [vmem:[%s6 + $0x30] sm:$0xff] %v2661
  %2673 = vst [vmem:[%s6 + $0x38] sm:$0xff] %v2664
  // Predicated region
  $region26: #{lstm_forward.1} parent=0 // pred_check
    _
  $region27: #{lstm_forward.1} parent=0 // pred_check_branch
    %2675 = sbr.rel (0) target = $region29
  $region28: #{lstm_forward.1} parent=0 // pred_region
    _
  $region29: #{lstm_forward.1} parent=0 // pred_fallthru
    _
  // Predicated region
  $region30: #{lstm_forward.1} parent=0 // pred_check
    _
  $region31: #{lstm_forward.1} parent=0 // pred_check_branch
    %2677 = sbr.rel (0) target = $region33
  $region32: #{lstm_forward.1} parent=0 // pred_region
    _
  $region33: #{lstm_forward.1} parent=0 // pred_fallthru
    _
  // Predicated region
  $region34: #{lstm_forward.1} parent=0 // pred_check
    _
  $region35: #{lstm_forward.1} parent=0 // pred_check_branch
    %2679 = sbr.rel (0) target = $region37
  $region36: #{lstm_forward.1} parent=0 // pred_region
    _
  $region37: #{lstm_forward.1} parent=0 // pred_fallthru
    _
  // Predicated region
  $region38: #{lstm_forward.1} parent=0 // pred_check
    _
  $region39: #{lstm_forward.1} parent=0 // pred_check_branch
    %2681 = sbr.rel (0) target = $region41
  $region40: #{lstm_forward.1} parent=0 // pred_region
    _
  $region41: #{lstm_forward.1} parent=0 // pred_fallthru
    _
  // Predicated region
  $region42: #{lstm_forward.1} parent=0 // pred_check
    _
  $region43: #{lstm_forward.1} parent=0 // pred_check_branch
    %2683 = sbr.rel (0) target = $region45
  $region44: #{lstm_forward.1} parent=0 // pred_region
    _
  $region45: #{lstm_forward.1} parent=0 // pred_fallthru
    _
  // Predicated region
  $region46: #{lstm_forward.1} parent=0 // pred_check
    _
  $region47: #{lstm_forward.1} parent=0 // pred_check_branch
    %2685 = sbr.rel (0) target = $region49
  $region48: #{lstm_forward.1} parent=0 // pred_region
    _
  $region49: #{lstm_forward.1} parent=0 // pred_fallthru
    _

</llo_original>
